<compile_context>
chip_gen: v7x
topology: tpu7x:2x2x1
jax: 0.10.0
libtpu: 0.0.40
codegen_flags: <defaults>
</compile_context>

<pallas_src>
import jax
import jax.numpy as jnp
from jax.experimental import pallas as pl
from jax.experimental.pallas import tpu as pltpu

EPS = 1e-5  # torch.nn.LayerNorm default


def _silu(x):
    # x * sigmoid(x) == 0.5*x + 0.5*x*tanh(0.5*x): one EUP op (tanh) instead of
    # exp + reciprocal on the largest activations.
    half = x * 0.5
    return half * jnp.tanh(half) + half


def _layernorm_nobias(x, gamma, act_dtype):
    # torch LayerNorm (bias=False): biased variance over the last dim.
    # Statistics always in f32 (bf16 accumulation over the feature dim is too
    # lossy and E[x^2]-mean^2 would cancel); the normalize runs in act_dtype.
    xf = x.astype(jnp.float32)
    mean = jnp.mean(xf, axis=-1, keepdims=True)
    var = jnp.mean(jnp.square(xf), axis=-1, keepdims=True) - jnp.square(mean)
    inv = jax.lax.rsqrt(var + EPS)
    return ((x - mean.astype(act_dtype)) * inv.astype(act_dtype)
            * gamma.astype(act_dtype))


def _make_kernel(act_dtype, mm_dtype):
    def kernel(
        rel_dist_ref,   # (1, TN, TM) f32
        embeds_ref,     # (1, TN, d)  f32   atom_embed(atoms)       tile over i
        nembeds_ref,    # (1, TM, d)  f32   neighbor_atom_embed     tile over j
        w1_ref, b1_ref, g1_ref,            # Radial: Linear(1,h), LN(h)   (act_dtype)
        w2_ref, b2_ref, g2_ref,            # Radial: Linear(h,h), LN(h)   (w2 mm_dtype)
        w3_ref, b3_ref,                    # Radial: Linear(h,d)          (w3 mm_dtype)
        wne_ref, wnn_ref, bn_ref, g3_ref,  # to_node_feats: Linear(2d,d) split, LN(d)
        wo_ref, bo_ref,                    # to_node_feats: Linear(d,d)
        out_ref,        # (1, TN, d)
        acc_ref,        # (TN, d) f32 scratch: neighbor_feats accumulator
    ):
        mi = pl.program_id(2)
        m_last = pl.num_programs(2) - 1

        @pl.when(mi == 0)
        def _():
            acc_ref[...] = jnp.zeros_like(acc_ref)

        tn = rel_dist_ref.shape[1]
        tm = rel_dist_ref.shape[2]
        d = out_ref.shape[2]

        x = rel_dist_ref[0].astype(act_dtype)              # (TN, TM)

        # ---- Radial MLP over the (i, j) pairs of this tile (hot path) ----
        # Linear(1, hidden): broadcast along a new trailing lane axis.
        z = x[:, :, None] * w1_ref[0] + b1_ref[0]          # (TN, TM, h)
        z = _silu(z)
        z = _layernorm_nobias(z, g1_ref[0], act_dtype)

        hdim = z.shape[-1]
        # Collapse leading dims only (TM multiple of the sublane tile keeps this
        # layout-preserving).  TODO(synk): use a rank-3 dot_general if Mosaic
        # lowers the (TN,TM,h) x (h,h) contraction directly.
        zf = z.reshape(tn * tm, hdim)
        zf = jnp.dot(zf.astype(mm_dtype), w2_ref[...],
                     preferred_element_type=jnp.float32)
        zf = (zf + b2_ref[...]).astype(act_dtype)
        zf = _silu(zf)
        zf = _layernorm_nobias(zf, g2_ref[0], act_dtype)
        feats = jnp.dot(zf.astype(mm_dtype), w3_ref[...],
                        preferred_element_type=jnp.float32) + b3_ref[...]
        feats = feats.reshape(tn, tm, d)                   # rel_dist_feats tile, f32

        # ---- einsum('b i j, b i j d, b j d -> b i d') with adj_mat == ones ----
        # accumulated per m-tile; the full (n, m, d) is never materialized.
        nemb = nembeds_ref[0]                              # (TM, d) f32
        acc_ref[...] += jnp.sum(feats * nemb[None, :, :], axis=1)

        # ---- to_node_feats on the last m-tile (concat-free, all f32) ----
        @pl.when(mi == m_last)
        def _():
            emb = embeds_ref[0]                            # (TN, d)
            # cat(emb, nf) @ wn == emb @ wn[:d] + nf @ wn[d:]
            y = (jnp.dot(emb, wne_ref[...], preferred_element_type=jnp.float32)
                 + jnp.dot(acc_ref[...], wnn_ref[...],
                           preferred_element_type=jnp.float32)
                 + bn_ref[...])
            y = _layernorm_nobias(y, g3_ref[0], jnp.float32)
            y = _silu(y)
            y = jnp.dot(y, wo_ref[...], preferred_element_type=jnp.float32) + bo_ref[...]
            out_ref[0] = y.astype(out_ref.dtype)

    return kernel


def _pick_tile(size, target, align):
    """Largest aligned tile <= target that divides size; else the full dim."""
    if size <= target:
        return size
    t = (target // align) * align
    while t >= align:
        if size % t == 0:
            return t
        t -= align
    # TODO(synk): no aligned divisor -> full dim; add a mask/padding path for
    # ragged n/m so the per-step footprint stays bounded on v7x.
    return size


def _default_precision():
    """bf16 hot path on chips with bf16 VPU/EUP (v6e/v7x); matmul-only cast elsewhere."""
    try:
        kind = jax.devices()[0].device_kind.lower()
    except Exception:
        return "bf16"
    if any(g in kind for g in ("v2", "v3", "v4", "v5")):
        return "bf16_matmul"
    return "bf16"


_PRECISION_DTYPES = {
    "f32": (jnp.float32, jnp.float32),
    "bf16_matmul": (jnp.float32, jnp.bfloat16),   # elementwise f32, MXU operands bf16
    "bf16": (jnp.bfloat16, jnp.bfloat16),         # full bf16 hot path
}


def node_scalar_feat_init(atoms, rel_dist, params, *,
                          tile_n=128, tile_m=128,
                          precision=None, vmem_limit_bytes=None):
    """atoms: int32 [b, n]; rel_dist: f32 [b, n, m] -> f32 [b, n, d]."""
    b, n = atoms.shape
    m = rel_dist.shape[-1]
    d = params["atom_embed"].shape[-1]
    hd = params["w1"].shape[-1]

    # neighbor_indices is None in this path, so the neighbor axis of rel_dist is
    # the node axis itself (neighbor embeds are indexed by j == atom j).
    assert rel_dist.shape == (b, n, n), "kernel assumes m == n (no neighbor_indices)"

    if precision is None:
        precision = _default_precision()
    act_dtype, mm_dtype = _PRECISION_DTYPES[precision]

    # Tile sizes: sublane-aligned for n, lane-aligned for m; fall back to the
    # full dim for small / non-divisible (toy) shapes.  TM=128 keeps the per-step
    # activation footprint v7x-safe (DMA per step is negligible vs compute).
    tn = _pick_tile(n, tile_n, 8)
    tm = _pick_tile(m, tile_m, 128)

    # atoms.masked_fill(atoms < 0, 0) + embedding lookups (glue gathers).
    atoms_c = jnp.where(atoms < 0, 0, atoms)
    embeds = jnp.take(params["atom_embed"], atoms_c, axis=0)            # (b, n, d)
    nembeds = jnp.take(params["neighbor_atom_embed"], atoms_c, axis=0)  # (b, m, d)

    # Split the 2d -> d projection so the kernel never builds the concat.
    wn_e = params["wn"][:d]
    wn_n = params["wn"][d:]

    # Pre-cast the radial-MLP weights to their compute dtypes (halves their DMA
    # and removes per-step in-kernel casts); biases stay f32 (added to f32 accums).
    w1 = params["w1"].astype(act_dtype)
    b1 = params["b1"].astype(act_dtype)
    g1 = params["g1"].astype(act_dtype)
    w2 = params["w2"].astype(mm_dtype)
    g2 = params["g2"].astype(act_dtype)
    w3 = params["w3"].astype(mm_dtype)

    def wspec(shape):
        # weight tensors: whole array every grid step
        return pl.BlockSpec(shape, lambda bi, ni, mi: tuple(0 for _ in shape))

    grid = (b, n // tn, m // tm)
    # TODO(synk): on v7x (2 TCs) flatten (b, n) into one parallel axis when b is
    # large and n < tile_n so both cores get full-size tiles.

    in_specs = [
        pl.BlockSpec((1, tn, tm), lambda bi, ni, mi: (bi, ni, mi)),  # rel_dist
        pl.BlockSpec((1, tn, d), lambda bi, ni, mi: (bi, ni, 0)),    # embeds (i)
        pl.BlockSpec((1, tm, d), lambda bi, ni, mi: (bi, mi, 0)),    # neighbor embeds (j)
        wspec((1, hd)), wspec((1, hd)), wspec((1, hd)),              # w1, b1, g1
        wspec((hd, hd)), wspec((1, hd)), wspec((1, hd)),             # w2, b2, g2
        wspec((hd, d)), wspec((1, d)),                               # w3, b3
        wspec((d, d)), wspec((d, d)), wspec((1, d)), wspec((1, d)),  # wn_e, wn_n, bn, g3
        wspec((d, d)), wspec((1, d)),                                # wo, bo
    ]

    cp = dict(dimension_semantics=("parallel", "parallel", "arbitrary"))
    if vmem_limit_bytes is not None:
        cp["vmem_limit_bytes"] = vmem_limit_bytes

    out = pl.pallas_call(
        _make_kernel(act_dtype, mm_dtype),
        out_shape=jax.ShapeDtypeStruct((b, n, d), rel_dist.dtype),
        grid_spec=pltpu.PrefetchScalarGridSpec(
            num_scalar_prefetch=0,
            grid=grid,
            in_specs=in_specs,
            out_specs=pl.BlockSpec((1, tn, d), lambda bi, ni, mi: (bi, ni, 0)),
            scratch_shapes=[pltpu.VMEM((tn, d), jnp.float32)],
        ),
        compiler_params=pltpu.CompilerParams(**cp),
    )(
        rel_dist, embeds, nembeds,
        w1, b1, g1,
        w2, params["b2"], g2,
        w3, params["b3"],
        wn_e, wn_n, params["bn"], params["g3"],
        params["wo"], params["bo"],
    )
    return out


def make_params(key, num_atoms, dim, hidden):
    ks = jax.random.split(key, 12)
    f32 = jnp.float32

    def u(k, shape, scale=0.1):
        return jax.random.normal(k, shape, dtype=f32) * scale

    params = dict(
        atom_embed=u(ks[0], (num_atoms, dim), 1.0),
        neighbor_atom_embed=u(ks[1], (num_atoms, dim), 1.0),
        # Radial MLP
        w1=u(ks[2], (1, hidden)), b1=u(ks[3], (1, hidden)),
        g1=jnp.ones((1, hidden), f32),
        w2=u(ks[4], (hidden, hidden)), b2=u(ks[5], (1, hidden)),
        g2=jnp.ones((1, hidden), f32),
        w3=u(ks[6], (hidden, dim)), b3=u(ks[7], (1, dim)),
        # to_node_feats
        wn=u(ks[8], (2 * dim, dim)), bn=u(ks[9], (1, dim)),
        g3=jnp.ones((1, dim), f32),
        wo=u(ks[10], (dim, dim)), bo=u(ks[11], (1, dim)),
    )
    return params


def reference(atoms, rel_dist, p):
    """Pure-JAX reference mirroring the PyTorch forward (adj_mat=None, mask=None)."""
    atoms_c = jnp.where(atoms < 0, 0, atoms)
    embeds = p["atom_embed"][atoms_c]                       # (b, n, d)
    nembeds = p["neighbor_atom_embed"][atoms_c]             # (b, n, d)

    x = rel_dist[..., None]                                 # (b, n, m, 1)
    h = x * p["w1"][0] + p["b1"][0]
    h = _silu(h)
    h = _layernorm_nobias(h, p["g1"][0], jnp.float32)
    h = h @ p["w2"] + p["b2"][0]
    h = _silu(h)
    h = _layernorm_nobias(h, p["g2"][0], jnp.float32)
    feats = h @ p["w3"] + p["b3"][0]                        # (b, n, m, d)

    neighbor_feats = jnp.einsum("bij,bijd,bjd->bid",
                                jnp.ones_like(rel_dist), feats, nembeds)
    cat = jnp.concatenate([embeds, neighbor_feats], axis=-1)
    y = cat @ p["wn"] + p["bn"][0]
    y = _layernorm_nobias(y, p["g3"][0], jnp.float32)
    y = _silu(y)
    return y @ p["wo"] + p["bo"][0]


if __name__ == "__main__":
    key = jax.random.PRNGKey(0)
    k_atoms, k_dist, k_params = jax.random.split(key, 3)

    batch, seq, dim, hidden, num_atoms = 2, 8, 32, 64, 10

    atoms = jax.random.randint(k_atoms, (batch, seq), -1, num_atoms, dtype=jnp.int32)
    rel_dist = jax.random.uniform(k_dist, (batch, seq, seq), dtype=jnp.float32) * 5.0

    params = make_params(k_params, num_atoms, dim, hidden)
    ref = reference(atoms, rel_dist, params)

    # Exact-precision path: tight check against the pure-JAX reference.
    out_f32 = jax.block_until_ready(
        node_scalar_feat_init(atoms, rel_dist, params, precision="f32"))
    assert out_f32.shape == (batch, seq, dim)
    assert jnp.allclose(out_f32, ref, atol=1e-4, rtol=1e-4), "f32 kernel mismatch"

    # Performance path (auto: bf16 hot path on v6e/v7x, bf16 matmul operands on v5-class).
    out_fast = jax.block_until_ready(node_scalar_feat_init(atoms, rel_dist, params))
    assert out_fast.shape == (batch, seq, dim)
    assert jnp.allclose(out_fast, ref, atol=5e-2, rtol=5e-2), "reduced-precision kernel drifted"

    print("KERNEL_OK")
</pallas_src>

<mosaic_0001>
module attributes {stable_mosaic.version = 11 : i64} {
  func.func @kernel(%arg0: i32, %arg1: i32, %arg2: i32, %arg3: memref<1x8x8xf32, #tpu.memory_space<vmem>>, %arg4: memref<1x8x32xf32, #tpu.memory_space<vmem>>, %arg5: memref<1x8x32xf32, #tpu.memory_space<vmem>>, %arg6: memref<1x64xf32, #tpu.memory_space<vmem>>, %arg7: memref<1x64xf32, #tpu.memory_space<vmem>>, %arg8: memref<1x64xf32, #tpu.memory_space<vmem>>, %arg9: memref<64x64xf32, #tpu.memory_space<vmem>>, %arg10: memref<1x64xf32, #tpu.memory_space<vmem>>, %arg11: memref<1x64xf32, #tpu.memory_space<vmem>>, %arg12: memref<64x32xf32, #tpu.memory_space<vmem>>, %arg13: memref<1x32xf32, #tpu.memory_space<vmem>>, %arg14: memref<32x32xf32, #tpu.memory_space<vmem>>, %arg15: memref<32x32xf32, #tpu.memory_space<vmem>>, %arg16: memref<1x32xf32, #tpu.memory_space<vmem>>, %arg17: memref<1x32xf32, #tpu.memory_space<vmem>>, %arg18: memref<32x32xf32, #tpu.memory_space<vmem>>, %arg19: memref<1x32xf32, #tpu.memory_space<vmem>>, %arg20: memref<1x8x32xf32, #tpu.memory_space<vmem>>, %arg21: memref<8x32xf32, #tpu.memory_space<vmem>>) attributes {dimension_semantics = [#tpu.dimension_semantics<parallel>, #tpu.dimension_semantics<parallel>, #tpu.dimension_semantics<arbitrary>], iteration_bounds = array<i64: 2, 1, 1>, scalar_prefetch = 0 : i64, scratch_operands = 1 : i64, tpu.core_type = #tpu.core_type<tc>, window_params = [{transform_indices = @transform_0, window_bounds = array<i64: 1, 8, 8>}, {transform_indices = @transform_1, window_bounds = array<i64: 1, 8, 32>}, {transform_indices = @transform_2, window_bounds = array<i64: 1, 8, 32>}, {pipeline_mode = #tpu.pipeline_mode<synchronous>, transform_indices = @transform_3, window_bounds = array<i64: 1, 64>}, {pipeline_mode = #tpu.pipeline_mode<synchronous>, transform_indices = @transform_4, window_bounds = array<i64: 1, 64>}, {pipeline_mode = #tpu.pipeline_mode<synchronous>, transform_indices = @transform_5, window_bounds = array<i64: 1, 64>}, {pipeline_mode = #tpu.pipeline_mode<synchronous>, transform_indices = @transform_6, window_bounds = array<i64: 64, 64>}, {pipeline_mode = #tpu.pipeline_mode<synchronous>, transform_indices = @transform_7, window_bounds = array<i64: 1, 64>}, {pipeline_mode = #tpu.pipeline_mode<synchronous>, transform_indices = @transform_8, window_bounds = array<i64: 1, 64>}, {pipeline_mode = #tpu.pipeline_mode<synchronous>, transform_indices = @transform_9, window_bounds = array<i64: 64, 32>}, {pipeline_mode = #tpu.pipeline_mode<synchronous>, transform_indices = @transform_10, window_bounds = array<i64: 1, 32>}, {pipeline_mode = #tpu.pipeline_mode<synchronous>, transform_indices = @transform_11, window_bounds = array<i64: 32, 32>}, {pipeline_mode = #tpu.pipeline_mode<synchronous>, transform_indices = @transform_12, window_bounds = array<i64: 32, 32>}, {pipeline_mode = #tpu.pipeline_mode<synchronous>, transform_indices = @transform_13, window_bounds = array<i64: 1, 32>}, {pipeline_mode = #tpu.pipeline_mode<synchronous>, transform_indices = @transform_14, window_bounds = array<i64: 1, 32>}, {pipeline_mode = #tpu.pipeline_mode<synchronous>, transform_indices = @transform_15, window_bounds = array<i64: 32, 32>}, {pipeline_mode = #tpu.pipeline_mode<synchronous>, transform_indices = @transform_16, window_bounds = array<i64: 1, 32>}, {transform_indices = @transform_17, window_bounds = array<i64: 1, 8, 32>}]} {
    %c0_i32 = arith.constant 0 : i32
    %0 = arith.cmpi eq, %arg2, %c0_i32 : i32
    %1 = arith.extui %0 : i1 to i32
    %c0_i32_0 = arith.constant 0 : i32
    %2 = arith.cmpi ne, %1, %c0_i32_0 : i32
    scf.if %2 {
      %cst_42 = arith.constant 0.000000e+00 : f32
      %97 = vector.broadcast %cst_42 : f32 to vector<8x32xf32>
      %c0_43 = arith.constant 0 : index
      %c0_44 = arith.constant 0 : index
      %98 = vector.load %arg21[%c0_43, %c0_44] : memref<8x32xf32, #tpu.memory_space<vmem>>, vector<8x32xf32>
      tpu.vector_store %arg21[%c0_43, %c0_44], %97 {strides = array<i32>} : memref<8x32xf32, #tpu.memory_space<vmem>>, vector<8x32xf32>,
    } else {
    }
    %c0 = arith.constant 0 : index
    %c0_1 = arith.constant 0 : index
    %c0_2 = arith.constant 0 : index
    %3 = vector.load %arg3[%c0, %c0_1, %c0_2] : memref<1x8x8xf32, #tpu.memory_space<vmem>>, vector<1x8x8xf32>
    %4 = vector.shape_cast %3 : vector<1x8x8xf32> to vector<8x8xf32>
    %5 = vector.shape_cast %4 : vector<8x8xf32> to vector<8x8x1xf32>
    %c0_3 = arith.constant 0 : index
    %c0_4 = arith.constant 0 : index
    %6 = vector.load %arg6[%c0_3, %c0_4] : memref<1x64xf32, #tpu.memory_space<vmem>>, vector<1x64xf32>
    %7 = vector.shape_cast %6 : vector<1x64xf32> to vector<64xf32>
    %8 = vector.shape_cast %7 : vector<64xf32> to vector<1x1x64xf32>
    %9 = vector.broadcast %5 : vector<8x8x1xf32> to vector<8x8x64xf32>
    %10 = vector.broadcast %8 : vector<1x1x64xf32> to vector<8x8x64xf32>
    %11 = arith.mulf %9, %10 : vector<8x8x64xf32>
    %c0_5 = arith.constant 0 : index
    %c0_6 = arith.constant 0 : index
    %12 = vector.load %arg7[%c0_5, %c0_6] : memref<1x64xf32, #tpu.memory_space<vmem>>, vector<1x64xf32>
    %13 = vector.shape_cast %12 : vector<1x64xf32> to vector<64xf32>
    %14 = vector.shape_cast %13 : vector<64xf32> to vector<1x1x64xf32>
    %15 = vector.broadcast %14 : vector<1x1x64xf32> to vector<8x8x64xf32>
    %16 = arith.addf %11, %15 : vector<8x8x64xf32>
    %cst = arith.constant 5.000000e-01 : f32
    %17 = vector.broadcast %cst : f32 to vector<8x8x64xf32>
    %18 = arith.mulf %16, %17 : vector<8x8x64xf32>
    %19 = math.tanh %18 : vector<8x8x64xf32>
    %20 = arith.mulf %18, %19 : vector<8x8x64xf32>
    %21 = arith.addf %20, %18 : vector<8x8x64xf32>
    %c0_7 = arith.constant 0 : index
    %c0_8 = arith.constant 0 : index
    %22 = vector.load %arg8[%c0_7, %c0_8] : memref<1x64xf32, #tpu.memory_space<vmem>>, vector<1x64xf32>
    %23 = vector.shape_cast %22 : vector<1x64xf32> to vector<64xf32>
    %cst_9 = arith.constant dense<0.000000e+00> : vector<8x8xf32>
    %24 = vector.multi_reduction <add>, %21, %cst_9 [2] : vector<8x8x64xf32> to vector<8x8xf32>
    %25 = vector.shape_cast %24 : vector<8x8xf32> to vector<8x8x1xf32>
    %cst_10 = arith.constant 6.400000e+01 : f32
    %26 = vector.broadcast %cst_10 : f32 to vector<8x8x1xf32>
    %27 = arith.divf %25, %26 : vector<8x8x1xf32>
    %28 = arith.mulf %21, %21 : vector<8x8x64xf32>
    %cst_11 = arith.constant dense<0.000000e+00> : vector<8x8xf32>
    %29 = vector.multi_reduction <add>, %28, %cst_11 [2] : vector<8x8x64xf32> to vector<8x8xf32>
    %30 = vector.shape_cast %29 : vector<8x8xf32> to vector<8x8x1xf32>
    %cst_12 = arith.constant 6.400000e+01 : f32
    %31 = vector.broadcast %cst_12 : f32 to vector<8x8x1xf32>
    %32 = arith.divf %30, %31 : vector<8x8x1xf32>
    %33 = arith.mulf %27, %27 : vector<8x8x1xf32>
    %34 = arith.subf %32, %33 : vector<8x8x1xf32>
    %cst_13 = arith.constant 9.99999974E-6 : f32
    %35 = vector.broadcast %cst_13 : f32 to vector<8x8x1xf32>
    %36 = arith.addf %34, %35 : vector<8x8x1xf32>
    %37 = math.rsqrt %36 : vector<8x8x1xf32>
    %38 = vector.broadcast %27 : vector<8x8x1xf32> to vector<8x8x64xf32>
    %39 = arith.subf %21, %38 : vector<8x8x64xf32>
    %40 = vector.broadcast %37 : vector<8x8x1xf32> to vector<8x8x64xf32>
    %41 = arith.mulf %39, %40 : vector<8x8x64xf32>
    %42 = vector.shape_cast %23 : vector<64xf32> to vector<1x1x64xf32>
    %43 = vector.broadcast %42 : vector<1x1x64xf32> to vector<8x8x64xf32>
    %44 = arith.mulf %41, %43 : vector<8x8x64xf32>
    %45 = vector.shape_cast %44 : vector<8x8x64xf32> to vector<64x64xf32>
    %c0_14 = arith.constant 0 : index
    %c0_15 = arith.constant 0 : index
    %46 = vector.load %arg9[%c0_14, %c0_15] : memref<64x64xf32, #tpu.memory_space<vmem>>, vector<64x64xf32>
    %cst_16 = arith.constant dense<0.000000e+00> : vector<64x64xf32>
    %47 = tpu.matmul %45, %46, %cst_16 {dimension_numbers = #tpu.dot_dimension_numbers<[1], [0], [0], [1], [0, 0, 1, 1], [], []>} : vector<64x64xf32>, vector<64x64xf32>, vector<64x64xf32> -> vector<64x64xf32>
    %c0_17 = arith.constant 0 : index
    %c0_18 = arith.constant 0 : index
    %48 = vector.load %arg10[%c0_17, %c0_18] : memref<1x64xf32, #tpu.memory_space<vmem>>, vector<1x64xf32>
    %49 = vector.broadcast %48 : vector<1x64xf32> to vector<64x64xf32>
    %50 = arith.addf %47, %49 : vector<64x64xf32>
    %cst_19 = arith.constant 5.000000e-01 : f32
    %51 = vector.broadcast %cst_19 : f32 to vector<64x64xf32>
    %52 = arith.mulf %50, %51 : vector<64x64xf32>
    %53 = math.tanh %52 : vector<64x64xf32>
    %54 = arith.mulf %52, %53 : vector<64x64xf32>
    %55 = arith.addf %54, %52 : vector<64x64xf32>
    %c0_20 = arith.constant 0 : index
    %c0_21 = arith.constant 0 : index
    %56 = vector.load %arg11[%c0_20, %c0_21] : memref<1x64xf32, #tpu.memory_space<vmem>>, vector<1x64xf32>
    %57 = vector.shape_cast %56 : vector<1x64xf32> to vector<64xf32>
    %cst_22 = arith.constant dense<0.000000e+00> : vector<64xf32>
    %58 = vector.multi_reduction <add>, %55, %cst_22 [1] : vector<64x64xf32> to vector<64xf32>
    %59 = vector.shape_cast %58 : vector<64xf32> to vector<64x1xf32>
    %cst_23 = arith.constant 6.400000e+01 : f32
    %60 = vector.broadcast %cst_23 : f32 to vector<64x1xf32>
    %61 = arith.divf %59, %60 : vector<64x1xf32>
    %62 = arith.mulf %55, %55 : vector<64x64xf32>
    %cst_24 = arith.constant dense<0.000000e+00> : vector<64xf32>
    %63 = vector.multi_reduction <add>, %62, %cst_24 [1] : vector<64x64xf32> to vector<64xf32>
    %64 = vector.shape_cast %63 : vector<64xf32> to vector<64x1xf32>
    %cst_25 = arith.constant 6.400000e+01 : f32
    %65 = vector.broadcast %cst_25 : f32 to vector<64x1xf32>
    %66 = arith.divf %64, %65 : vector<64x1xf32>
    %67 = arith.mulf %61, %61 : vector<64x1xf32>
    %68 = arith.subf %66, %67 : vector<64x1xf32>
    %cst_26 = arith.constant 9.99999974E-6 : f32
    %69 = vector.broadcast %cst_26 : f32 to vector<64x1xf32>
    %70 = arith.addf %68, %69 : vector<64x1xf32>
    %71 = math.rsqrt %70 : vector<64x1xf32>
    %72 = vector.broadcast %61 : vector<64x1xf32> to vector<64x64xf32>
    %73 = arith.subf %55, %72 : vector<64x64xf32>
    %74 = vector.broadcast %71 : vector<64x1xf32> to vector<64x64xf32>
    %75 = arith.mulf %73, %74 : vector<64x64xf32>
    %76 = vector.shape_cast %57 : vector<64xf32> to vector<1x64xf32>
    %77 = vector.broadcast %76 : vector<1x64xf32> to vector<64x64xf32>
    %78 = arith.mulf %75, %77 : vector<64x64xf32>
    %c0_27 = arith.constant 0 : index
    %c0_28 = arith.constant 0 : index
    %79 = vector.load %arg12[%c0_27, %c0_28] : memref<64x32xf32, #tpu.memory_space<vmem>>, vector<64x32xf32>
    %cst_29 = arith.constant dense<0.000000e+00> : vector<64x32xf32>
    %80 = tpu.matmul %78, %79, %cst_29 {dimension_numbers = #tpu.dot_dimension_numbers<[1], [0], [0], [1], [0, 0, 1, 1], [], []>} : vector<64x64xf32>, vector<64x32xf32>, vector<64x32xf32> -> vector<64x32xf32>
    %c0_30 = arith.constant 0 : index
    %c0_31 = arith.constant 0 : index
    %81 = vector.load %arg13[%c0_30, %c0_31] : memref<1x32xf32, #tpu.memory_space<vmem>>, vector<1x32xf32>
    %82 = vector.broadcast %81 : vector<1x32xf32> to vector<64x32xf32>
    %83 = arith.addf %80, %82 : vector<64x32xf32>
    %84 = vector.shape_cast %83 : vector<64x32xf32> to vector<8x8x32xf32>
    %c0_32 = arith.constant 0 : index
    %c0_33 = arith.constant 0 : index
    %c0_34 = arith.constant 0 : index
    %85 = vector.load %arg5[%c0_32, %c0_33, %c0_34] : memref<1x8x32xf32, #tpu.memory_space<vmem>>, vector<1x8x32xf32>
    %86 = vector.shape_cast %85 : vector<1x8x32xf32> to vector<8x32xf32>
    %c0_35 = arith.constant 0 : index
    %c0_36 = arith.constant 0 : index
    %87 = vector.load %arg21[%c0_35, %c0_36] : memref<8x32xf32, #tpu.memory_space<vmem>>, vector<8x32xf32>
    %88 = vector.shape_cast %86 : vector<8x32xf32> to vector<1x8x32xf32>
    %89 = vector.broadcast %88 : vector<1x8x32xf32> to vector<8x8x32xf32>
    %90 = arith.mulf %84, %89 : vector<8x8x32xf32>
    %cst_37 = arith.constant dense<0.000000e+00> : vector<8x32xf32>
    %91 = vector.multi_reduction <add>, %90, %cst_37 [1] : vector<8x8x32xf32> to vector<8x32xf32>
    %92 = arith.addf %87, %91 : vector<8x32xf32>
    %c0_38 = arith.constant 0 : index
    %c0_39 = arith.constant 0 : index
    %93 = vector.load %arg21[%c0_38, %c0_39] : memref<8x32xf32, #tpu.memory_space<vmem>>, vector<8x32xf32>
    tpu.vector_store %arg21[%c0_38, %c0_39], %92 {strides = array<i32>} : memref<8x32xf32, #tpu.memory_space<vmem>>, vector<8x32xf32>,
    %c0_i32_40 = arith.constant 0 : i32
    %94 = arith.cmpi eq, %arg2, %c0_i32_40 : i32
    %95 = arith.extui %94 : i1 to i32
    %c0_i32_41 = arith.constant 0 : i32
    %96 = arith.cmpi ne, %95, %c0_i32_41 : i32
    scf.if %96 {
      %c0_42 = arith.constant 0 : index
      %c0_43 = arith.constant 0 : index
      %c0_44 = arith.constant 0 : index
      %97 = vector.load %arg4[%c0_42, %c0_43, %c0_44] : memref<1x8x32xf32, #tpu.memory_space<vmem>>, vector<1x8x32xf32>
      %98 = vector.shape_cast %97 : vector<1x8x32xf32> to vector<8x32xf32>
      %c0_45 = arith.constant 0 : index
      %c0_46 = arith.constant 0 : index
      %99 = vector.load %arg14[%c0_45, %c0_46] : memref<32x32xf32, #tpu.memory_space<vmem>>, vector<32x32xf32>
      %cst_47 = arith.constant dense<0.000000e+00> : vector<8x32xf32>
      %100 = tpu.matmul %98, %99, %cst_47 {dimension_numbers = #tpu.dot_dimension_numbers<[1], [0], [0], [1], [0, 0, 1, 1], [], []>} : vector<8x32xf32>, vector<32x32xf32>, vector<8x32xf32> -> vector<8x32xf32>
      %c0_48 = arith.constant 0 : index
      %c0_49 = arith.constant 0 : index
      %101 = vector.load %arg21[%c0_48, %c0_49] : memref<8x32xf32, #tpu.memory_space<vmem>>, vector<8x32xf32>
      %c0_50 = arith.constant 0 : index
      %c0_51 = arith.constant 0 : index
      %102 = vector.load %arg15[%c0_50, %c0_51] : memref<32x32xf32, #tpu.memory_space<vmem>>, vector<32x32xf32>
      %cst_52 = arith.constant dense<0.000000e+00> : vector<8x32xf32>
      %103 = tpu.matmul %101, %102, %cst_52 {dimension_numbers = #tpu.dot_dimension_numbers<[1], [0], [0], [1], [0, 0, 1, 1], [], []>} : vector<8x32xf32>, vector<32x32xf32>, vector<8x32xf32> -> vector<8x32xf32>
      %104 = arith.addf %100, %103 : vector<8x32xf32>
      %c0_53 = arith.constant 0 : index
      %c0_54 = arith.constant 0 : index
      %105 = vector.load %arg16[%c0_53, %c0_54] : memref<1x32xf32, #tpu.memory_space<vmem>>, vector<1x32xf32>
      %106 = vector.broadcast %105 : vector<1x32xf32> to vector<8x32xf32>
      %107 = arith.addf %104, %106 : vector<8x32xf32>
      %c0_55 = arith.constant 0 : index
      %c0_56 = arith.constant 0 : index
      %108 = vector.load %arg17[%c0_55, %c0_56] : memref<1x32xf32, #tpu.memory_space<vmem>>, vector<1x32xf32>
      %109 = vector.shape_cast %108 : vector<1x32xf32> to vector<32xf32>
      %cst_57 = arith.constant dense<0.000000e+00> : vector<8xf32>
      %110 = vector.multi_reduction <add>, %107, %cst_57 [1] : vector<8x32xf32> to vector<8xf32>
      %111 = vector.shape_cast %110 : vector<8xf32> to vector<8x1xf32>
      %cst_58 = arith.constant 3.200000e+01 : f32
      %112 = vector.broadcast %cst_58 : f32 to vector<8x1xf32>
      %113 = arith.divf %111, %112 : vector<8x1xf32>
      %114 = arith.mulf %107, %107 : vector<8x32xf32>
      %cst_59 = arith.constant dense<0.000000e+00> : vector<8xf32>
      %115 = vector.multi_reduction <add>, %114, %cst_59 [1] : vector<8x32xf32> to vector<8xf32>
      %116 = vector.shape_cast %115 : vector<8xf32> to vector<8x1xf32>
      %cst_60 = arith.constant 3.200000e+01 : f32
      %117 = vector.broadcast %cst_60 : f32 to vector<8x1xf32>
      %118 = arith.divf %116, %117 : vector<8x1xf32>
      %119 = arith.mulf %113, %113 : vector<8x1xf32>
      %120 = arith.subf %118, %119 : vector<8x1xf32>
      %cst_61 = arith.constant 9.99999974E-6 : f32
      %121 = vector.broadcast %cst_61 : f32 to vector<8x1xf32>
      %122 = arith.addf %120, %121 : vector<8x1xf32>
      %123 = math.rsqrt %122 : vector<8x1xf32>
      %124 = vector.broadcast %113 : vector<8x1xf32> to vector<8x32xf32>
      %125 = arith.subf %107, %124 : vector<8x32xf32>
      %126 = vector.broadcast %123 : vector<8x1xf32> to vector<8x32xf32>
      %127 = arith.mulf %125, %126 : vector<8x32xf32>
      %128 = vector.shape_cast %109 : vector<32xf32> to vector<1x32xf32>
      %129 = vector.broadcast %128 : vector<1x32xf32> to vector<8x32xf32>
      %130 = arith.mulf %127, %129 : vector<8x32xf32>
      %cst_62 = arith.constant 5.000000e-01 : f32
      %131 = vector.broadcast %cst_62 : f32 to vector<8x32xf32>
      %132 = arith.mulf %130, %131 : vector<8x32xf32>
      %133 = math.tanh %132 : vector<8x32xf32>
      %134 = arith.mulf %132, %133 : vector<8x32xf32>
      %135 = arith.addf %134, %132 : vector<8x32xf32>
      %c0_63 = arith.constant 0 : index
      %c0_64 = arith.constant 0 : index
      %136 = vector.load %arg18[%c0_63, %c0_64] : memref<32x32xf32, #tpu.memory_space<vmem>>, vector<32x32xf32>
      %cst_65 = arith.constant dense<0.000000e+00> : vector<8x32xf32>
      %137 = tpu.matmul %135, %136, %cst_65 {dimension_numbers = #tpu.dot_dimension_numbers<[1], [0], [0], [1], [0, 0, 1, 1], [], []>} : vector<8x32xf32>, vector<32x32xf32>, vector<8x32xf32> -> vector<8x32xf32>
      %c0_66 = arith.constant 0 : index
      %c0_67 = arith.constant 0 : index
      %138 = vector.load %arg19[%c0_66, %c0_67] : memref<1x32xf32, #tpu.memory_space<vmem>>, vector<1x32xf32>
      %139 = vector.broadcast %138 : vector<1x32xf32> to vector<8x32xf32>
      %140 = arith.addf %137, %139 : vector<8x32xf32>
      %c0_68 = arith.constant 0 : index
      %c0_69 = arith.constant 0 : index
      %c0_70 = arith.constant 0 : index
      %141 = vector.load %arg20[%c0_68, %c0_69, %c0_70] : memref<1x8x32xf32, #tpu.memory_space<vmem>>, vector<1x8x32xf32>
      %142 = vector.shape_cast %141 : vector<1x8x32xf32> to vector<8x32xf32>
      %143 = vector.shape_cast %140 : vector<8x32xf32> to vector<1x8x32xf32>
      tpu.vector_store %arg20[%c0_68, %c0_69, %c0_70], %143 {strides = array<i32>} : memref<1x8x32xf32, #tpu.memory_space<vmem>>, vector<1x8x32xf32>,
    } else {
    }
    return
  }
  func.func @transform_0(%arg0: i32, %arg1: i32, %arg2: i32) -> (i32, i32, i32) {
    %c0_i32 = arith.constant 0 : i32
    return %arg0, %arg1, %arg2 : i32, i32, i32
  }
  func.func @transform_1(%arg0: i32, %arg1: i32, %arg2: i32) -> (i32, i32, i32) {
    %c0_i32 = arith.constant 0 : i32
    %c0_i32_0 = arith.constant 0 : i32
    return %arg0, %arg1, %c0_i32 : i32, i32, i32
  }
  func.func @transform_2(%arg0: i32, %arg1: i32, %arg2: i32) -> (i32, i32, i32) {
    %c0_i32 = arith.constant 0 : i32
    %c0_i32_0 = arith.constant 0 : i32
    return %arg0, %arg2, %c0_i32 : i32, i32, i32
  }
  func.func @transform_3(%arg0: i32, %arg1: i32, %arg2: i32) -> (i32, i32) {
    %c0_i32 = arith.constant 0 : i32
    %c0_i32_0 = arith.constant 0 : i32
    %c0_i32_1 = arith.constant 0 : i32
    return %c0_i32, %c0_i32_0 : i32, i32
  }
  func.func @transform_4(%arg0: i32, %arg1: i32, %arg2: i32) -> (i32, i32) {
    %c0_i32 = arith.constant 0 : i32
    %c0_i32_0 = arith.constant 0 : i32
    %c0_i32_1 = arith.constant 0 : i32
    return %c0_i32, %c0_i32_0 : i32, i32
  }
  func.func @transform_5(%arg0: i32, %arg1: i32, %arg2: i32) -> (i32, i32) {
    %c0_i32 = arith.constant 0 : i32
    %c0_i32_0 = arith.constant 0 : i32
    %c0_i32_1 = arith.constant 0 : i32
    return %c0_i32, %c0_i32_0 : i32, i32
  }
  func.func @transform_6(%arg0: i32, %arg1: i32, %arg2: i32) -> (i32, i32) {
    %c0_i32 = arith.constant 0 : i32
    %c0_i32_0 = arith.constant 0 : i32
    %c0_i32_1 = arith.constant 0 : i32
    return %c0_i32, %c0_i32_0 : i32, i32
  }
  func.func @transform_7(%arg0: i32, %arg1: i32, %arg2: i32) -> (i32, i32) {
    %c0_i32 = arith.constant 0 : i32
    %c0_i32_0 = arith.constant 0 : i32
    %c0_i32_1 = arith.constant 0 : i32
    return %c0_i32, %c0_i32_0 : i32, i32
  }
  func.func @transform_8(%arg0: i32, %arg1: i32, %arg2: i32) -> (i32, i32) {
    %c0_i32 = arith.constant 0 : i32
    %c0_i32_0 = arith.constant 0 : i32
    %c0_i32_1 = arith.constant 0 : i32
    return %c0_i32, %c0_i32_0 : i32, i32
  }
  func.func @transform_9(%arg0: i32, %arg1: i32, %arg2: i32) -> (i32, i32) {
    %c0_i32 = arith.constant 0 : i32
    %c0_i32_0 = arith.constant 0 : i32
    %c0_i32_1 = arith.constant 0 : i32
    return %c0_i32, %c0_i32_0 : i32, i32
  }
  func.func @transform_10(%arg0: i32, %arg1: i32, %arg2: i32) -> (i32, i32) {
    %c0_i32 = arith.constant 0 : i32
    %c0_i32_0 = arith.constant 0 : i32
    %c0_i32_1 = arith.constant 0 : i32
    return %c0_i32, %c0_i32_0 : i32, i32
  }
  func.func @transform_11(%arg0: i32, %arg1: i32, %arg2: i32) -> (i32, i32) {
    %c0_i32 = arith.constant 0 : i32
    %c0_i32_0 = arith.constant 0 : i32
    %c0_i32_1 = arith.constant 0 : i32
    return %c0_i32, %c0_i32_0 : i32, i32
  }
  func.func @transform_12(%arg0: i32, %arg1: i32, %arg2: i32) -> (i32, i32) {
    %c0_i32 = arith.constant 0 : i32
    %c0_i32_0 = arith.constant 0 : i32
    %c0_i32_1 = arith.constant 0 : i32
    return %c0_i32, %c0_i32_0 : i32, i32
  }
  func.func @transform_13(%arg0: i32, %arg1: i32, %arg2: i32) -> (i32, i32) {
    %c0_i32 = arith.constant 0 : i32
    %c0_i32_0 = arith.constant 0 : i32
    %c0_i32_1 = arith.constant 0 : i32
    return %c0_i32, %c0_i32_0 : i32, i32
  }
  func.func @transform_14(%arg0: i32, %arg1: i32, %arg2: i32) -> (i32, i32) {
    %c0_i32 = arith.constant 0 : i32
    %c0_i32_0 = arith.constant 0 : i32
    %c0_i32_1 = arith.constant 0 : i32
    return %c0_i32, %c0_i32_0 : i32, i32
  }
  func.func @transform_15(%arg0: i32, %arg1: i32, %arg2: i32) -> (i32, i32) {
    %c0_i32 = arith.constant 0 : i32
    %c0_i32_0 = arith.constant 0 : i32
    %c0_i32_1 = arith.constant 0 : i32
    return %c0_i32, %c0_i32_0 : i32, i32
  }
  func.func @transform_16(%arg0: i32, %arg1: i32, %arg2: i32) -> (i32, i32) {
    %c0_i32 = arith.constant 0 : i32
    %c0_i32_0 = arith.constant 0 : i32
    %c0_i32_1 = arith.constant 0 : i32
    return %c0_i32, %c0_i32_0 : i32, i32
  }
  func.func @transform_17(%arg0: i32, %arg1: i32, %arg2: i32) -> (i32, i32, i32) {
    %c0_i32 = arith.constant 0 : i32
    %c0_i32_0 = arith.constant 0 : i32
    return %arg0, %arg1, %c0_i32 : i32, i32, i32
  }
}

</mosaic_0001>

<llo_original>
// kernel: tpu_custom_call.1
$region0: #{tpu_custom_call.1}
  #allocation0 [shape = 'u32[]', space=smem, size = 0x4, offset = 0x4, fixed_abs, tag = 'smem constant byte address 0x4 - core index']
  #allocation1 [shape = 'u32[144,128]{1,0:T(1,128)}', space=vmem, size = 0x12000, scoped, tag = 'internal scratch']
  #allocation2 [shape = 'f32[8,32]{1,0:T(8,128)}', space=vmem, size = 0x1000, scoped, tag = 'scratch operand']
  %s0 = inlined_call_operand.hbm [shape: f32[2,8,8], index: 0, kind: input, shape index: {}]
  %s1 = inlined_call_operand.hbm [shape: f32[2,8,32], index: 1, kind: input, shape index: {}]
  %s2 = inlined_call_operand.hbm [shape: f32[2,8,32], index: 2, kind: input, shape index: {}]
  %s3 = inlined_call_operand.vmem [shape: f32[1,64], index: 3, kind: input, shape index: {}]
  %s4 = inlined_call_operand.vmem [shape: f32[1,64], index: 4, kind: input, shape index: {}]
  %s5 = inlined_call_operand.hbm [shape: f32[1,64], index: 5, kind: input, shape index: {}]
  %s6 = inlined_call_operand.vmem [shape: f32[64,64], index: 6, kind: input, shape index: {}]
  %s7 = inlined_call_operand.hbm [shape: f32[1,64], index: 7, kind: input, shape index: {}]
  %s8 = inlined_call_operand.hbm [shape: f32[1,64], index: 8, kind: input, shape index: {}]
  %s9 = inlined_call_operand.vmem [shape: f32[64,32], index: 9, kind: input, shape index: {}]
  %s10 = inlined_call_operand.vmem [shape: f32[1,32], index: 10, kind: input, shape index: {}]
  %s11 = inlined_call_operand.vmem [shape: f32[32,32], index: 11, kind: input, shape index: {}]
  %s12 = inlined_call_operand.hbm [shape: f32[32,32], index: 12, kind: input, shape index: {}]
  %s13 = inlined_call_operand.vmem [shape: f32[1,32], index: 13, kind: input, shape index: {}]
  %s14 = inlined_call_operand.vmem [shape: f32[1,32], index: 14, kind: input, shape index: {}]
  %s15 = inlined_call_operand.hbm [shape: f32[32,32], index: 15, kind: input, shape index: {}]
  %s16 = inlined_call_operand.vmem [shape: f32[1,32], index: 16, kind: input, shape index: {}]
  %s17 = inlined_call_operand.hbm [shape: f32[2,8,32], index: 17, kind: output, shape index: {}]
  %s18 = sld [smem:[#allocation0]]
  $region141: #{tpu_custom_call.1} parent=0
    _
  %s20 = ssub.s32 1, %s18
  %s21 = scalar_select 0, %s20, %s18
  $region1: #{tpu_custom_call.1} parent=0
    #allocation3 [shape = 'u8[8192]{0}', space=vmem, size = 0x2000, scoped, tag = 'input window, operand 0']
    #allocation4 [shape = 's32[2]{0}', space=sflag, size = 0x8, scoped, tag = 'scoped memory for tpu_custom_call.1']
    #allocation5 [shape = 's32[2]{0}', space=sflag, size = 0x8, scoped, tag = 'scoped memory for tpu_custom_call.1']
    #allocation6 [shape = 'u8[8192]{0}', space=vmem, size = 0x2000, scoped, tag = 'input window, operand 1']
    #allocation7 [shape = 's32[2]{0}', space=sflag, size = 0x8, scoped, tag = 'scoped memory for tpu_custom_call.1']
    #allocation8 [shape = 'u8[8192]{0}', space=vmem, size = 0x2000, scoped, tag = 'input window, operand 2']
    #allocation9 [shape = 'u8[512]{0}', space=vmem, size = 0x400, scoped, tag = 'input window, operand 5, single buffered']
    #allocation10 [shape = 's32[1]{0}', space=sflag, size = 0x4, scoped, tag = 'scoped memory for tpu_custom_call.1']
    #allocation11 [shape = 'u8[512]{0}', space=vmem, size = 0x400, scoped, tag = 'input window, operand 7, single buffered']
    #allocation12 [shape = 'u8[512]{0}', space=vmem, size = 0x400, scoped, tag = 'input window, operand 8, single buffered']
    #allocation13 [shape = 's32[1]{0}', space=sflag, size = 0x4, scoped, tag = 'scoped memory for tpu_custom_call.1']
    #allocation14 [shape = 'u8[16384]{0}', space=vmem, size = 0x4000, scoped, tag = 'input window, operand 12, single buffered']
    #allocation15 [shape = 'u8[16384]{0}', space=vmem, size = 0x4000, scoped, tag = 'input window, operand 15, single buffered']
    #allocation16 [shape = 's32[1]{0}', space=sflag, size = 0x4, scoped, tag = 'scoped memory for tpu_custom_call.1']
    #allocation17 [shape = 'u8[8192]{0}', space=vmem, size = 0x2000, scoped, tag = 'output window, operand 0']
    %22 = vsyncpa [#allocation4], 0
    %s23 = scalar_lea.sflag [#allocation4], 1
    %24 = vsyncpa %s23, 0
    %25 = vsyncpa [#allocation7], 0
    %s26 = scalar_lea.sflag [#allocation7], 1
    %27 = vsyncpa %s26, 0
    %28 = vsyncpa [#allocation10], 0
    %29 = vsyncpa [#allocation13], 0
    %30 = vsyncpa [#allocation16], 0
    %31 = vsyncpa [#allocation5], 0
    %s32 = scalar_lea.sflag [#allocation5], 1
    %33 = vsyncpa %s32, 0
    loop: start=0, step=1, limit=4
    $region2: #{tpu_custom_call.1} parent=1 // loop_pre_header
      _
    $region3: #{tpu_custom_call.1} parent=1 // loop_header
      %s35 = sphi 0, %s39
      %p36 = scmp.ge.s32.totalorder %s35, 4
      %s42 = sphi 0, %s61
      %s43 = sphi 0, %s57
      %s44 = sphi 0, %s53
      %s45 = sphi 0, %s42
      %s46 = sphi 0, %s43
      %s47 = sphi 0, %s44
      %s48 = sphi 0, %s45
      %s49 = sphi 0, %s46
      %s50 = sphi 0, %s47
      %s68 = sphi 0, %s70
      %s71 = sphi 0, %s68
      %s72 = sphi 0, %s71
      %s88 = sphi 0, %s72
      %s96 = sphi 0, %s98
      %s99 = sphi 0, %s96
      %s100 = sphi 0, %s99
      %s116 = sphi 0, %s100
      %s124 = sphi 0, %s126
      %s127 = sphi 0, %s124
      %s128 = sphi 0, %s127
      %s144 = sphi 0, %s128
      %s148 = sphi 0, %s148
      %s150 = sphi 0, %s148
      %s151 = sphi 0, %s150
      %s165 = sphi 0, %s151
      %s169 = sphi 0, %s169
      %s171 = sphi 0, %s169
      %s172 = sphi 0, %s171
      %s186 = sphi 0, %s172
      %s190 = sphi 0, %s190
      %s192 = sphi 0, %s190
      %s193 = sphi 0, %s192
      %s207 = sphi 0, %s193
      %s211 = sphi 0, %s211
      %s213 = sphi 0, %s211
      %s214 = sphi 0, %s213
      %s228 = sphi 0, %s214
      %s232 = sphi 0, %s232
      %s234 = sphi 0, %s232
      %s235 = sphi 0, %s234
      %s249 = sphi 0, %s235
      %s253 = sphi 0, %s253
      %s255 = sphi 0, %s253
      %s256 = sphi 0, %s255
      %s270 = sphi 0, %s256
      %s274 = sphi 0, %s274
      %s276 = sphi 0, %s274
      %s277 = sphi 0, %s276
      %s291 = sphi 0, %s277
      %s295 = sphi 0, %s295
      %s297 = sphi 0, %s295
      %s298 = sphi 0, %s297
      %s312 = sphi 0, %s298
      %s316 = sphi 0, %s316
      %s318 = sphi 0, %s316
      %s319 = sphi 0, %s318
      %s333 = sphi 0, %s319
      %s337 = sphi 0, %s337
      %s339 = sphi 0, %s337
      %s340 = sphi 0, %s339
      %s354 = sphi 0, %s340
      %s358 = sphi 0, %s358
      %s360 = sphi 0, %s358
      %s361 = sphi 0, %s360
      %s375 = sphi 0, %s361
      %s379 = sphi 0, %s379
      %s381 = sphi 0, %s379
      %s382 = sphi 0, %s381
      %s396 = sphi 0, %s382
      %s400 = sphi 0, %s400
      %s402 = sphi 0, %s400
      %s403 = sphi 0, %s402
      %s417 = sphi 0, %s403
      %s421 = sphi 0, %s421
      %s423 = sphi 0, %s421
      %s424 = sphi 0, %s423
      %s438 = sphi 0, %s424
      %s446 = sphi 0, %s448
      %s449 = sphi 0, %s446
      %s450 = sphi 0, %s449
      %s466 = sphi 0, %s450
    $region4: #{tpu_custom_call.1} parent=1 // loop_header_branch
      %38 = sbr.rel (%p36) target = $region8
    $region5: #{tpu_custom_call.1} parent=1 // loop_body
      %s40 = ssub.s32 %s35, 1
      %s41 = ssub.s32 %s35, 2
      %s51 = sadd.s32 1, %s44
      %p52 = scmp.ge.s32.totalorder %s51, 1
      %s53 = scalar_select %p52, 0, %s51
      %s54 = sadd.s32 1, %s43
      %s55 = scalar_select %p52, %s54, %s43
      %p56 = scmp.ge.s32.totalorder %s55, 1
      %s57 = scalar_select %p56, 0, %s55
      %s58 = sadd.s32 1, %s42
      %s59 = scalar_select %p56, %s58, %s42
      %p60 = scmp.ge.s32.totalorder %s59, 2
      %s61 = scalar_select %p60, 0, %s59
      %s62 = ssub.s32 %s42, %s61
      %s63 = ssub.s32 %s43, %s57
      %s64 = sor.u32 %s62, %s63
      %s65 = ssub.s32 %s44, %s53
      %s66 = sor.u32 %s64, %s65
      %p67 = scmp.eq.s32.totalorder %s66, 0
      %s69 = sadd.s32 %s68, 1
      %s70 = scalar_select %p67, %s68, %s69
      %p73 = pneg %p67
      %p74 = scmp.eq.s32.totalorder %s35, 1
      %p75 = por %p73, %p74
      %p76 = scmp.ne.s32.totalorder %s68, %s71
      %p77 = scmp.eq.s32.totalorder %s35, 0
      %p78 = por %p76, %p77
      %p79 = scmp.ne.s32.totalorder %s68, %s71
      %p80 = scmp.eq.s32.totalorder %s40, 1
      %p81 = por %p79, %p80
      %p82 = scmp.ne.s32.totalorder %s71, %s72
      %p83 = scmp.eq.s32.totalorder %s40, 0
      %p84 = por %p82, %p83
      %p85 = scmp.ne.s32.totalorder %s71, %s72
      %p86 = scmp.eq.s32.totalorder %s41, 1
      %p87 = por %p85, %p86
      %p89 = scmp.ne.s32.totalorder %s72, %s88
      %p90 = scmp.eq.s32.totalorder %s41, 0
      %p91 = por %p89, %p90
      %s92 = ssub.s32 %s42, %s61
      %s93 = ssub.s32 %s43, %s57
      %s94 = sor.u32 %s92, %s93
      %p95 = scmp.eq.s32.totalorder %s94, 0
      %s97 = sadd.s32 %s96, 1
      %s98 = scalar_select %p95, %s96, %s97
      %p101 = pneg %p95
      %p102 = scmp.eq.s32.totalorder %s35, 1
      %p103 = por %p101, %p102
      %p104 = scmp.ne.s32.totalorder %s96, %s99
      %p105 = scmp.eq.s32.totalorder %s35, 0
      %p106 = por %p104, %p105
      %p107 = scmp.ne.s32.totalorder %s96, %s99
      %p108 = scmp.eq.s32.totalorder %s40, 1
      %p109 = por %p107, %p108
      %p110 = scmp.ne.s32.totalorder %s99, %s100
      %p111 = scmp.eq.s32.totalorder %s40, 0
      %p112 = por %p110, %p111
      %p113 = scmp.ne.s32.totalorder %s99, %s100
      %p114 = scmp.eq.s32.totalorder %s41, 1
      %p115 = por %p113, %p114
      %p117 = scmp.ne.s32.totalorder %s100, %s116
      %p118 = scmp.eq.s32.totalorder %s41, 0
      %p119 = por %p117, %p118
      %s120 = ssub.s32 %s42, %s61
      %s121 = ssub.s32 %s44, %s53
      %s122 = sor.u32 %s120, %s121
      %p123 = scmp.eq.s32.totalorder %s122, 0
      %s125 = sadd.s32 %s124, 1
      %s126 = scalar_select %p123, %s124, %s125
      %p129 = pneg %p123
      %p130 = scmp.eq.s32.totalorder %s35, 1
      %p131 = por %p129, %p130
      %p132 = scmp.ne.s32.totalorder %s124, %s127
      %p133 = scmp.eq.s32.totalorder %s35, 0
      %p134 = por %p132, %p133
      %p135 = scmp.ne.s32.totalorder %s124, %s127
      %p136 = scmp.eq.s32.totalorder %s40, 1
      %p137 = por %p135, %p136
      %p138 = scmp.ne.s32.totalorder %s127, %s128
      %p139 = scmp.eq.s32.totalorder %s40, 0
      %p140 = por %p138, %p139
      %p141 = scmp.ne.s32.totalorder %s127, %s128
      %p142 = scmp.eq.s32.totalorder %s41, 1
      %p143 = por %p141, %p142
      %p145 = scmp.ne.s32.totalorder %s128, %s144
      %p146 = scmp.eq.s32.totalorder %s41, 0
      %p147 = por %p145, %p146
      %s149 = sadd.s32 %s148, 1
      %p152 = scmp.eq.s32.totalorder %s35, 1
      %p153 = scmp.ne.s32.totalorder %s148, %s150
      %p154 = scmp.eq.s32.totalorder %s35, 0
      %p155 = por %p153, %p154
      %p156 = scmp.ne.s32.totalorder %s148, %s150
      %p157 = scmp.eq.s32.totalorder %s40, 1
      %p158 = por %p156, %p157
      %p159 = scmp.ne.s32.totalorder %s150, %s151
      %p160 = scmp.eq.s32.totalorder %s40, 0
      %p161 = por %p159, %p160
      %p162 = scmp.ne.s32.totalorder %s150, %s151
      %p163 = scmp.eq.s32.totalorder %s41, 1
      %p164 = por %p162, %p163
      %p166 = scmp.ne.s32.totalorder %s151, %s165
      %p167 = scmp.eq.s32.totalorder %s41, 0
      %p168 = por %p166, %p167
      %s170 = sadd.s32 %s169, 1
      %p173 = scmp.eq.s32.totalorder %s35, 1
      %p174 = scmp.ne.s32.totalorder %s169, %s171
      %p175 = scmp.eq.s32.totalorder %s35, 0
      %p176 = por %p174, %p175
      %p177 = scmp.ne.s32.totalorder %s169, %s171
      %p178 = scmp.eq.s32.totalorder %s40, 1
      %p179 = por %p177, %p178
      %p180 = scmp.ne.s32.totalorder %s171, %s172
      %p181 = scmp.eq.s32.totalorder %s40, 0
      %p182 = por %p180, %p181
      %p183 = scmp.ne.s32.totalorder %s171, %s172
      %p184 = scmp.eq.s32.totalorder %s41, 1
      %p185 = por %p183, %p184
      %p187 = scmp.ne.s32.totalorder %s172, %s186
      %p188 = scmp.eq.s32.totalorder %s41, 0
      %p189 = por %p187, %p188
      %s191 = sadd.s32 %s190, 1
      %p194 = scmp.eq.s32.totalorder %s35, 1
      %p195 = scmp.ne.s32.totalorder %s190, %s192
      %p196 = scmp.eq.s32.totalorder %s35, 0
      %p197 = por %p195, %p196
      %p198 = scmp.ne.s32.totalorder %s190, %s192
      %p199 = scmp.eq.s32.totalorder %s40, 1
      %p200 = por %p198, %p199
      %p201 = scmp.ne.s32.totalorder %s192, %s193
      %p202 = scmp.eq.s32.totalorder %s40, 0
      %p203 = por %p201, %p202
      %p204 = scmp.ne.s32.totalorder %s192, %s193
      %p205 = scmp.eq.s32.totalorder %s41, 1
      %p206 = por %p204, %p205
      %p208 = scmp.ne.s32.totalorder %s193, %s207
      %p209 = scmp.eq.s32.totalorder %s41, 0
      %p210 = por %p208, %p209
      %s212 = sadd.s32 %s211, 1
      %p215 = scmp.eq.s32.totalorder %s35, 1
      %p216 = scmp.ne.s32.totalorder %s211, %s213
      %p217 = scmp.eq.s32.totalorder %s35, 0
      %p218 = por %p216, %p217
      %p219 = scmp.ne.s32.totalorder %s211, %s213
      %p220 = scmp.eq.s32.totalorder %s40, 1
      %p221 = por %p219, %p220
      %p222 = scmp.ne.s32.totalorder %s213, %s214
      %p223 = scmp.eq.s32.totalorder %s40, 0
      %p224 = por %p222, %p223
      %p225 = scmp.ne.s32.totalorder %s213, %s214
      %p226 = scmp.eq.s32.totalorder %s41, 1
      %p227 = por %p225, %p226
      %p229 = scmp.ne.s32.totalorder %s214, %s228
      %p230 = scmp.eq.s32.totalorder %s41, 0
      %p231 = por %p229, %p230
      %s233 = sadd.s32 %s232, 1
      %p236 = scmp.eq.s32.totalorder %s35, 1
      %p237 = scmp.ne.s32.totalorder %s232, %s234
      %p238 = scmp.eq.s32.totalorder %s35, 0
      %p239 = por %p237, %p238
      %p240 = scmp.ne.s32.totalorder %s232, %s234
      %p241 = scmp.eq.s32.totalorder %s40, 1
      %p242 = por %p240, %p241
      %p243 = scmp.ne.s32.totalorder %s234, %s235
      %p244 = scmp.eq.s32.totalorder %s40, 0
      %p245 = por %p243, %p244
      %p246 = scmp.ne.s32.totalorder %s234, %s235
      %p247 = scmp.eq.s32.totalorder %s41, 1
      %p248 = por %p246, %p247
      %p250 = scmp.ne.s32.totalorder %s235, %s249
      %p251 = scmp.eq.s32.totalorder %s41, 0
      %p252 = por %p250, %p251
      %s254 = sadd.s32 %s253, 1
      %p257 = scmp.eq.s32.totalorder %s35, 1
      %p258 = scmp.ne.s32.totalorder %s253, %s255
      %p259 = scmp.eq.s32.totalorder %s35, 0
      %p260 = por %p258, %p259
      %p261 = scmp.ne.s32.totalorder %s253, %s255
      %p262 = scmp.eq.s32.totalorder %s40, 1
      %p263 = por %p261, %p262
      %p264 = scmp.ne.s32.totalorder %s255, %s256
      %p265 = scmp.eq.s32.totalorder %s40, 0
      %p266 = por %p264, %p265
      %p267 = scmp.ne.s32.totalorder %s255, %s256
      %p268 = scmp.eq.s32.totalorder %s41, 1
      %p269 = por %p267, %p268
      %p271 = scmp.ne.s32.totalorder %s256, %s270
      %p272 = scmp.eq.s32.totalorder %s41, 0
      %p273 = por %p271, %p272
      %s275 = sadd.s32 %s274, 1
      %p278 = scmp.eq.s32.totalorder %s35, 1
      %p279 = scmp.ne.s32.totalorder %s274, %s276
      %p280 = scmp.eq.s32.totalorder %s35, 0
      %p281 = por %p279, %p280
      %p282 = scmp.ne.s32.totalorder %s274, %s276
      %p283 = scmp.eq.s32.totalorder %s40, 1
      %p284 = por %p282, %p283
      %p285 = scmp.ne.s32.totalorder %s276, %s277
      %p286 = scmp.eq.s32.totalorder %s40, 0
      %p287 = por %p285, %p286
      %p288 = scmp.ne.s32.totalorder %s276, %s277
      %p289 = scmp.eq.s32.totalorder %s41, 1
      %p290 = por %p288, %p289
      %p292 = scmp.ne.s32.totalorder %s277, %s291
      %p293 = scmp.eq.s32.totalorder %s41, 0
      %p294 = por %p292, %p293
      %s296 = sadd.s32 %s295, 1
      %p299 = scmp.eq.s32.totalorder %s35, 1
      %p300 = scmp.ne.s32.totalorder %s295, %s297
      %p301 = scmp.eq.s32.totalorder %s35, 0
      %p302 = por %p300, %p301
      %p303 = scmp.ne.s32.totalorder %s295, %s297
      %p304 = scmp.eq.s32.totalorder %s40, 1
      %p305 = por %p303, %p304
      %p306 = scmp.ne.s32.totalorder %s297, %s298
      %p307 = scmp.eq.s32.totalorder %s40, 0
      %p308 = por %p306, %p307
      %p309 = scmp.ne.s32.totalorder %s297, %s298
      %p310 = scmp.eq.s32.totalorder %s41, 1
      %p311 = por %p309, %p310
      %p313 = scmp.ne.s32.totalorder %s298, %s312
      %p314 = scmp.eq.s32.totalorder %s41, 0
      %p315 = por %p313, %p314
      %s317 = sadd.s32 %s316, 1
      %p320 = scmp.eq.s32.totalorder %s35, 1
      %p321 = scmp.ne.s32.totalorder %s316, %s318
      %p322 = scmp.eq.s32.totalorder %s35, 0
      %p323 = por %p321, %p322
      %p324 = scmp.ne.s32.totalorder %s316, %s318
      %p325 = scmp.eq.s32.totalorder %s40, 1
      %p326 = por %p324, %p325
      %p327 = scmp.ne.s32.totalorder %s318, %s319
      %p328 = scmp.eq.s32.totalorder %s40, 0
      %p329 = por %p327, %p328
      %p330 = scmp.ne.s32.totalorder %s318, %s319
      %p331 = scmp.eq.s32.totalorder %s41, 1
      %p332 = por %p330, %p331
      %p334 = scmp.ne.s32.totalorder %s319, %s333
      %p335 = scmp.eq.s32.totalorder %s41, 0
      %p336 = por %p334, %p335
      %s338 = sadd.s32 %s337, 1
      %p341 = scmp.eq.s32.totalorder %s35, 1
      %p342 = scmp.ne.s32.totalorder %s337, %s339
      %p343 = scmp.eq.s32.totalorder %s35, 0
      %p344 = por %p342, %p343
      %p345 = scmp.ne.s32.totalorder %s337, %s339
      %p346 = scmp.eq.s32.totalorder %s40, 1
      %p347 = por %p345, %p346
      %p348 = scmp.ne.s32.totalorder %s339, %s340
      %p349 = scmp.eq.s32.totalorder %s40, 0
      %p350 = por %p348, %p349
      %p351 = scmp.ne.s32.totalorder %s339, %s340
      %p352 = scmp.eq.s32.totalorder %s41, 1
      %p353 = por %p351, %p352
      %p355 = scmp.ne.s32.totalorder %s340, %s354
      %p356 = scmp.eq.s32.totalorder %s41, 0
      %p357 = por %p355, %p356
      %s359 = sadd.s32 %s358, 1
      %p362 = scmp.eq.s32.totalorder %s35, 1
      %p363 = scmp.ne.s32.totalorder %s358, %s360
      %p364 = scmp.eq.s32.totalorder %s35, 0
      %p365 = por %p363, %p364
      %p366 = scmp.ne.s32.totalorder %s358, %s360
      %p367 = scmp.eq.s32.totalorder %s40, 1
      %p368 = por %p366, %p367
      %p369 = scmp.ne.s32.totalorder %s360, %s361
      %p370 = scmp.eq.s32.totalorder %s40, 0
      %p371 = por %p369, %p370
      %p372 = scmp.ne.s32.totalorder %s360, %s361
      %p373 = scmp.eq.s32.totalorder %s41, 1
      %p374 = por %p372, %p373
      %p376 = scmp.ne.s32.totalorder %s361, %s375
      %p377 = scmp.eq.s32.totalorder %s41, 0
      %p378 = por %p376, %p377
      %s380 = sadd.s32 %s379, 1
      %p383 = scmp.eq.s32.totalorder %s35, 1
      %p384 = scmp.ne.s32.totalorder %s379, %s381
      %p385 = scmp.eq.s32.totalorder %s35, 0
      %p386 = por %p384, %p385
      %p387 = scmp.ne.s32.totalorder %s379, %s381
      %p388 = scmp.eq.s32.totalorder %s40, 1
      %p389 = por %p387, %p388
      %p390 = scmp.ne.s32.totalorder %s381, %s382
      %p391 = scmp.eq.s32.totalorder %s40, 0
      %p392 = por %p390, %p391
      %p393 = scmp.ne.s32.totalorder %s381, %s382
      %p394 = scmp.eq.s32.totalorder %s41, 1
      %p395 = por %p393, %p394
      %p397 = scmp.ne.s32.totalorder %s382, %s396
      %p398 = scmp.eq.s32.totalorder %s41, 0
      %p399 = por %p397, %p398
      %s401 = sadd.s32 %s400, 1
      %p404 = scmp.eq.s32.totalorder %s35, 1
      %p405 = scmp.ne.s32.totalorder %s400, %s402
      %p406 = scmp.eq.s32.totalorder %s35, 0
      %p407 = por %p405, %p406
      %p408 = scmp.ne.s32.totalorder %s400, %s402
      %p409 = scmp.eq.s32.totalorder %s40, 1
      %p410 = por %p408, %p409
      %p411 = scmp.ne.s32.totalorder %s402, %s403
      %p412 = scmp.eq.s32.totalorder %s40, 0
      %p413 = por %p411, %p412
      %p414 = scmp.ne.s32.totalorder %s402, %s403
      %p415 = scmp.eq.s32.totalorder %s41, 1
      %p416 = por %p414, %p415
      %p418 = scmp.ne.s32.totalorder %s403, %s417
      %p419 = scmp.eq.s32.totalorder %s41, 0
      %p420 = por %p418, %p419
      %s422 = sadd.s32 %s421, 1
      %p425 = scmp.eq.s32.totalorder %s35, 1
      %p426 = scmp.ne.s32.totalorder %s421, %s423
      %p427 = scmp.eq.s32.totalorder %s35, 0
      %p428 = por %p426, %p427
      %p429 = scmp.ne.s32.totalorder %s421, %s423
      %p430 = scmp.eq.s32.totalorder %s40, 1
      %p431 = por %p429, %p430
      %p432 = scmp.ne.s32.totalorder %s423, %s424
      %p433 = scmp.eq.s32.totalorder %s40, 0
      %p434 = por %p432, %p433
      %p435 = scmp.ne.s32.totalorder %s423, %s424
      %p436 = scmp.eq.s32.totalorder %s41, 1
      %p437 = por %p435, %p436
      %p439 = scmp.ne.s32.totalorder %s424, %s438
      %p440 = scmp.eq.s32.totalorder %s41, 0
      %p441 = por %p439, %p440
      %s442 = ssub.s32 %s42, %s61
      %s443 = ssub.s32 %s43, %s57
      %s444 = sor.u32 %s442, %s443
      %p445 = scmp.eq.s32.totalorder %s444, 0
      %s447 = sadd.s32 %s446, 1
      %s448 = scalar_select %p445, %s446, %s447
      %p451 = pneg %p445
      %p452 = scmp.eq.s32.totalorder %s35, 1
      %p453 = por %p451, %p452
      %p454 = scmp.ne.s32.totalorder %s446, %s449
      %p455 = scmp.eq.s32.totalorder %s35, 0
      %p456 = por %p454, %p455
      %p457 = scmp.ne.s32.totalorder %s446, %s449
      %p458 = scmp.eq.s32.totalorder %s40, 1
      %p459 = por %p457, %p458
      %p460 = scmp.ne.s32.totalorder %s449, %s450
      %p461 = scmp.eq.s32.totalorder %s40, 0
      %p462 = por %p460, %p461
      %p463 = scmp.ne.s32.totalorder %s449, %s450
      %p464 = scmp.eq.s32.totalorder %s41, 1
      %p465 = por %p463, %p464
      %p467 = scmp.ne.s32.totalorder %s450, %s466
      %p468 = scmp.eq.s32.totalorder %s41, 0
      %p469 = por %p467, %p468
      %p470 = scmp.le.s32.totalorder 1, %s35
      %p471 = scmp.lt.s32.totalorder %s35, 3
      %p472 = pnand %p470, %p471
      %p473 = pneg %p472
      // Predicated region
      $region9: #{tpu_custom_call.1} parent=5 // pred_check
        _
      $region10: #{tpu_custom_call.1} parent=5 // pred_check_branch
        %475 = sbr.rel (%p472) target = $region12
      $region11: #{tpu_custom_call.1} parent=5 // pred_region
        %s476 = ssub.s32 %s35, 1
        // Predicated region
        $region13: #{tpu_custom_call.1} parent=11 // pred_check
          %p477 = pneg %p161
        $region14: #{tpu_custom_call.1} parent=11 // pred_check_branch
          %479 = sbr.rel (%p477) target = $region16
        $region15: #{tpu_custom_call.1} parent=11 // pred_region
          _
        $region16: #{tpu_custom_call.1} parent=11 // pred_fallthru
          _
        // Predicated region
        $region17: #{tpu_custom_call.1} parent=11 // pred_check
          %p480 = pneg %p182
        $region18: #{tpu_custom_call.1} parent=11 // pred_check_branch
          %482 = sbr.rel (%p480) target = $region20
        $region19: #{tpu_custom_call.1} parent=11 // pred_region
          _
        $region20: #{tpu_custom_call.1} parent=11 // pred_fallthru
          _
        // Predicated region
        $region21: #{tpu_custom_call.1} parent=11 // pred_check
          %p483 = pneg %p203
        $region22: #{tpu_custom_call.1} parent=11 // pred_check_branch
          %485 = sbr.rel (%p483) target = $region24
        $region23: #{tpu_custom_call.1} parent=11 // pred_region
          %s487 = ssub.s32 16, 16
          %488 = vsyncadd [#allocation10], %s487
          %s490 = sshll.u32 [#allocation9], 4
          %s491 = int_to_ptr.vmem [resolvable:$true] %s490
          %493 = dma.hbm_to_vmem [thread:$0]  %s5, 16, %s491, [#allocation10]
        $region24: #{tpu_custom_call.1} parent=11 // pred_fallthru
          _
        // Predicated region
        $region25: #{tpu_custom_call.1} parent=11 // pred_check
          %p494 = pneg %p224
        $region26: #{tpu_custom_call.1} parent=11 // pred_check_branch
          %496 = sbr.rel (%p494) target = $region28
        $region27: #{tpu_custom_call.1} parent=11 // pred_region
          _
        $region28: #{tpu_custom_call.1} parent=11 // pred_fallthru
          _
        // Predicated region
        $region29: #{tpu_custom_call.1} parent=11 // pred_check
          %p497 = pneg %p245
        $region30: #{tpu_custom_call.1} parent=11 // pred_check_branch
          %499 = sbr.rel (%p497) target = $region32
        $region31: #{tpu_custom_call.1} parent=11 // pred_region
          %s501 = ssub.s32 16, 16
          %502 = vsyncadd [#allocation10], %s501
          %s504 = sshll.u32 [#allocation11], 4
          %s505 = int_to_ptr.vmem [resolvable:$true] %s504
          %507 = dma.hbm_to_vmem [thread:$0]  %s7, 16, %s505, [#allocation10]
        $region32: #{tpu_custom_call.1} parent=11 // pred_fallthru
          _
        // Predicated region
        $region33: #{tpu_custom_call.1} parent=11 // pred_check
          %p508 = pneg %p266
        $region34: #{tpu_custom_call.1} parent=11 // pred_check_branch
          %510 = sbr.rel (%p508) target = $region36
        $region35: #{tpu_custom_call.1} parent=11 // pred_region
          %s512 = ssub.s32 16, 16
          %513 = vsyncadd [#allocation13], %s512
          %s515 = sshll.u32 [#allocation12], 4
          %s516 = int_to_ptr.vmem [resolvable:$true] %s515
          %518 = dma.hbm_to_vmem [thread:$0]  %s8, 16, %s516, [#allocation13]
        $region36: #{tpu_custom_call.1} parent=11 // pred_fallthru
          _
        // Predicated region
        $region37: #{tpu_custom_call.1} parent=11 // pred_check
          %p519 = pneg %p287
        $region38: #{tpu_custom_call.1} parent=11 // pred_check_branch
          %521 = sbr.rel (%p519) target = $region40
        $region39: #{tpu_custom_call.1} parent=11 // pred_region
          _
        $region40: #{tpu_custom_call.1} parent=11 // pred_fallthru
          _
        // Predicated region
        $region41: #{tpu_custom_call.1} parent=11 // pred_check
          %p522 = pneg %p308
        $region42: #{tpu_custom_call.1} parent=11 // pred_check_branch
          %524 = sbr.rel (%p522) target = $region44
        $region43: #{tpu_custom_call.1} parent=11 // pred_region
          _
        $region44: #{tpu_custom_call.1} parent=11 // pred_fallthru
          _
        // Predicated region
        $region45: #{tpu_custom_call.1} parent=11 // pred_check
          %p525 = pneg %p329
        $region46: #{tpu_custom_call.1} parent=11 // pred_check_branch
          %527 = sbr.rel (%p525) target = $region48
        $region47: #{tpu_custom_call.1} parent=11 // pred_region
          _
        $region48: #{tpu_custom_call.1} parent=11 // pred_fallthru
          _
        // Predicated region
        $region49: #{tpu_custom_call.1} parent=11 // pred_check
          %p528 = pneg %p350
        $region50: #{tpu_custom_call.1} parent=11 // pred_check_branch
          %530 = sbr.rel (%p528) target = $region52
        $region51: #{tpu_custom_call.1} parent=11 // pred_region
          %s532 = ssub.s32 512, 512
          %533 = vsyncadd [#allocation13], %s532
          %s534 = sshll.u32 [#allocation14], 4
          %s535 = int_to_ptr.vmem [resolvable:$true] %s534
          %540 = dma.hbm_to_vmem [thread:$0]  %s12, 512, %s535, [#allocation13], 128, 128, 8
        $region52: #{tpu_custom_call.1} parent=11 // pred_fallthru
          _
        // Predicated region
        $region53: #{tpu_custom_call.1} parent=11 // pred_check
          %p541 = pneg %p371
        $region54: #{tpu_custom_call.1} parent=11 // pred_check_branch
          %543 = sbr.rel (%p541) target = $region56
        $region55: #{tpu_custom_call.1} parent=11 // pred_region
          _
        $region56: #{tpu_custom_call.1} parent=11 // pred_fallthru
          _
        // Predicated region
        $region57: #{tpu_custom_call.1} parent=11 // pred_check
          %p544 = pneg %p392
        $region58: #{tpu_custom_call.1} parent=11 // pred_check_branch
          %546 = sbr.rel (%p544) target = $region60
        $region59: #{tpu_custom_call.1} parent=11 // pred_region
          _
        $region60: #{tpu_custom_call.1} parent=11 // pred_fallthru
          _
        // Predicated region
        $region61: #{tpu_custom_call.1} parent=11 // pred_check
          %p547 = pneg %p413
        $region62: #{tpu_custom_call.1} parent=11 // pred_check_branch
          %549 = sbr.rel (%p547) target = $region64
        $region63: #{tpu_custom_call.1} parent=11 // pred_region
          %s551 = ssub.s32 512, 512
          %552 = vsyncadd [#allocation16], %s551
          %s553 = sshll.u32 [#allocation15], 4
          %s554 = int_to_ptr.vmem [resolvable:$true] %s553
          %559 = dma.hbm_to_vmem [thread:$0]  %s15, 512, %s554, [#allocation16], 128, 128, 8
        $region64: #{tpu_custom_call.1} parent=11 // pred_fallthru
          _
        // Predicated region
        $region65: #{tpu_custom_call.1} parent=11 // pred_check
          %p560 = pneg %p434
        $region66: #{tpu_custom_call.1} parent=11 // pred_check_branch
          %562 = sbr.rel (%p560) target = $region68
        $region67: #{tpu_custom_call.1} parent=11 // pred_region
          _
        $region68: #{tpu_custom_call.1} parent=11 // pred_fallthru
          _
      $region12: #{tpu_custom_call.1} parent=5 // pred_fallthru
        _
      %p563 = scmp.lt.s32.totalorder %s35, 2
      // Predicated region
      $region69: #{tpu_custom_call.1} parent=5 // pred_check
        %p564 = pneg %p563
      $region70: #{tpu_custom_call.1} parent=5 // pred_check_branch
        %566 = sbr.rel (%p564) target = $region72
      $region71: #{tpu_custom_call.1} parent=5 // pred_region
        // Predicated region
        $region73: #{tpu_custom_call.1} parent=71 // pred_check
          %p567 = pneg %p78
        $region74: #{tpu_custom_call.1} parent=71 // pred_check_branch
          %569 = sbr.rel (%p567) target = $region76
        $region75: #{tpu_custom_call.1} parent=71 // pred_region
          %s570 = sand.u32 %s68, 1
          %s571 = scalar_lea.sflag [#allocation4], %s570
          %s572 = sand.u32 %s68, 1
          %s573 = smul.addr %s572, 8
          %s574 = scalar_lea.vmem [#allocation3], %s573
          %s576 = ssub.s32 128, 128
          %577 = vsyncadd %s571, %s576
          %s578 = sadd.s32 %s44, %s43
          %s579 = sadd.s32 %s578, %s42
          %s580 = smul.addr %s579, 128
          %s581 = scalar_lea.hbm %s0, %s580
          %s583 = sshll.u32 %s574, 4
          %s584 = int_to_ptr.vmem [resolvable:$true] %s583
          %586 = dma.hbm_to_vmem [thread:$0]  %s581, 128, %s584, %s571
        $region76: #{tpu_custom_call.1} parent=71 // pred_fallthru
          _
        // Predicated region
        $region77: #{tpu_custom_call.1} parent=71 // pred_check
          %p587 = pneg %p106
        $region78: #{tpu_custom_call.1} parent=71 // pred_check_branch
          %589 = sbr.rel (%p587) target = $region80
        $region79: #{tpu_custom_call.1} parent=71 // pred_region
          %s590 = sand.u32 %s35, 1
          %s591 = scalar_lea.sflag [#allocation7], %s590
          %s592 = sand.u32 %s96, 1
          %s593 = smul.addr %s592, 8
          %s594 = scalar_lea.vmem [#allocation6], %s593
          %s596 = ssub.s32 128, 128
          %597 = vsyncadd %s591, %s596
          %s598 = sadd.s32 %s43, %s42
          %s599 = smul.addr %s598, 128
          %s600 = scalar_lea.hbm %s1, %s599
          %s602 = sshll.u32 %s594, 4
          %s603 = int_to_ptr.vmem [resolvable:$true] %s602
          %605 = dma.hbm_to_vmem [thread:$0]  %s600, 128, %s603, %s591
        $region80: #{tpu_custom_call.1} parent=71 // pred_fallthru
          _
        // Predicated region
        $region81: #{tpu_custom_call.1} parent=71 // pred_check
          %p606 = pneg %p134
        $region82: #{tpu_custom_call.1} parent=71 // pred_check_branch
          %608 = sbr.rel (%p606) target = $region84
        $region83: #{tpu_custom_call.1} parent=71 // pred_region
          %s609 = sand.u32 %s35, 1
          %s610 = scalar_lea.sflag [#allocation7], %s609
          %s611 = sand.u32 %s124, 1
          %s612 = smul.addr %s611, 8
          %s613 = scalar_lea.vmem [#allocation8], %s612
          %s615 = ssub.s32 128, 128
          %616 = vsyncadd %s610, %s615
          %s617 = sadd.s32 %s44, %s42
          %s618 = smul.addr %s617, 128
          %s619 = scalar_lea.hbm %s2, %s618
          %s621 = sshll.u32 %s613, 4
          %s622 = int_to_ptr.vmem [resolvable:$true] %s621
          %624 = dma.hbm_to_vmem [thread:$0]  %s619, 128, %s622, %s610
        $region84: #{tpu_custom_call.1} parent=71 // pred_fallthru
          _
      $region72: #{tpu_custom_call.1} parent=5 // pred_fallthru
        _
      %p625 = scmp.le.s32.totalorder 1, %s35
      %p626 = scmp.lt.s32.totalorder %s35, 3
      %p627 = pnand %p625, %p626
      %p628 = pneg %p627
      // Predicated region
      $region85: #{tpu_custom_call.1} parent=5 // pred_check
        _
      $region86: #{tpu_custom_call.1} parent=5 // pred_check_branch
        %630 = sbr.rel (%p627) target = $region88
      $region87: #{tpu_custom_call.1} parent=5 // pred_region
        %s631 = ssub.s32 %s35, 1
        %s632 = sand.u32 %s71, 1
        %s633 = scalar_lea.sflag [#allocation4], %s632
        %s634 = sand.u32 %s71, 1
        %s635 = smul.addr %s634, 8
        %s636 = scalar_lea.vmem [#allocation3], %s635
        // Predicated region
        $region89: #{tpu_custom_call.1} parent=87 // pred_check
          %p637 = pneg %p84
        $region90: #{tpu_custom_call.1} parent=87 // pred_check_branch
          %639 = sbr.rel (%p637) target = $region92
        $region91: #{tpu_custom_call.1} parent=87 // pred_region
          %640 = dma.done %s633, 128
        $region92: #{tpu_custom_call.1} parent=87 // pred_fallthru
          _
        %s641 = sand.u32 %s40, 1
        %s642 = scalar_lea.sflag [#allocation7], %s641
        %s643 = sand.u32 %s99, 1
        %s644 = smul.addr %s643, 8
        %s645 = scalar_lea.vmem [#allocation6], %s644
        // Predicated region
        $region93: #{tpu_custom_call.1} parent=87 // pred_check
          %p646 = pneg %p112
        $region94: #{tpu_custom_call.1} parent=87 // pred_check_branch
          %648 = sbr.rel (%p646) target = $region96
        $region95: #{tpu_custom_call.1} parent=87 // pred_region
          %649 = dma.done %s642, 128
        $region96: #{tpu_custom_call.1} parent=87 // pred_fallthru
          _
        %s650 = sand.u32 %s40, 1
        %s651 = scalar_lea.sflag [#allocation7], %s650
        %s652 = sand.u32 %s127, 1
        %s653 = smul.addr %s652, 8
        %s654 = scalar_lea.vmem [#allocation8], %s653
        // Predicated region
        $region97: #{tpu_custom_call.1} parent=87 // pred_check
          %p655 = pneg %p140
        $region98: #{tpu_custom_call.1} parent=87 // pred_check_branch
          %657 = sbr.rel (%p655) target = $region100
        $region99: #{tpu_custom_call.1} parent=87 // pred_region
          %658 = dma.done %s651, 128
        $region100: #{tpu_custom_call.1} parent=87 // pred_fallthru
          _
        // Predicated region
        $region101: #{tpu_custom_call.1} parent=87 // pred_check
          %p659 = pneg %p203
        $region102: #{tpu_custom_call.1} parent=87 // pred_check_branch
          %661 = sbr.rel (%p659) target = $region104
        $region103: #{tpu_custom_call.1} parent=87 // pred_region
          %662 = dma.done [#allocation10], 16
        $region104: #{tpu_custom_call.1} parent=87 // pred_fallthru
          _
        // Predicated region
        $region105: #{tpu_custom_call.1} parent=87 // pred_check
          %p663 = pneg %p245
        $region106: #{tpu_custom_call.1} parent=87 // pred_check_branch
          %665 = sbr.rel (%p663) target = $region108
        $region107: #{tpu_custom_call.1} parent=87 // pred_region
          %666 = dma.done [#allocation10], 16
        $region108: #{tpu_custom_call.1} parent=87 // pred_fallthru
          _
        // Predicated region
        $region109: #{tpu_custom_call.1} parent=87 // pred_check
          %p667 = pneg %p266
        $region110: #{tpu_custom_call.1} parent=87 // pred_check_branch
          %669 = sbr.rel (%p667) target = $region112
        $region111: #{tpu_custom_call.1} parent=87 // pred_region
          %670 = dma.done [#allocation13], 16
        $region112: #{tpu_custom_call.1} parent=87 // pred_fallthru
          _
        // Predicated region
        $region113: #{tpu_custom_call.1} parent=87 // pred_check
          %p671 = pneg %p350
        $region114: #{tpu_custom_call.1} parent=87 // pred_check_branch
          %673 = sbr.rel (%p671) target = $region116
        $region115: #{tpu_custom_call.1} parent=87 // pred_region
          %674 = dma.done [#allocation13], 512
        $region116: #{tpu_custom_call.1} parent=87 // pred_fallthru
          _
        // Predicated region
        $region117: #{tpu_custom_call.1} parent=87 // pred_check
          %p675 = pneg %p413
        $region118: #{tpu_custom_call.1} parent=87 // pred_check_branch
          %677 = sbr.rel (%p675) target = $region120
        $region119: #{tpu_custom_call.1} parent=87 // pred_region
          %678 = dma.done [#allocation16], 512
        $region120: #{tpu_custom_call.1} parent=87 // pred_fallthru
          _
        %s679 = sand.u32 %s71, 1
        %s680 = scalar_lea.sflag [#allocation4], %s679
        %s681 = sand.u32 %s71, 1
        %s682 = smul.addr %s681, 8
        %s683 = scalar_lea.vmem [#allocation3], %s682
        %p684 = pneg %p84
        %p685 = pneg %p81
        %s686 = sand.u32 %s40, 1
        %s687 = scalar_lea.sflag [#allocation7], %s686
        %s688 = sand.u32 %s99, 1
        %s689 = smul.addr %s688, 8
        %s690 = scalar_lea.vmem [#allocation6], %s689
        %p691 = pneg %p112
        %p692 = pneg %p109
        %s693 = sand.u32 %s40, 1
        %s694 = scalar_lea.sflag [#allocation7], %s693
        %s695 = sand.u32 %s127, 1
        %s696 = smul.addr %s695, 8
        %s697 = scalar_lea.vmem [#allocation8], %s696
        %p698 = pneg %p140
        %p699 = pneg %p137
        %p700 = pneg %p161
        %p701 = pneg %p158
        %p702 = pneg %p182
        %p703 = pneg %p179
        %p704 = pneg %p203
        %p705 = pneg %p200
        %p706 = pneg %p224
        %p707 = pneg %p221
        %p708 = pneg %p245
        %p709 = pneg %p242
        %p710 = pneg %p266
        %p711 = pneg %p263
        %p712 = pneg %p287
        %p713 = pneg %p284
        %p714 = pneg %p308
        %p715 = pneg %p305
        %p716 = pneg %p329
        %p717 = pneg %p326
        %p718 = pneg %p350
        %p719 = pneg %p347
        %p720 = pneg %p371
        %p721 = pneg %p368
        %p722 = pneg %p392
        %p723 = pneg %p389
        %p724 = pneg %p413
        %p725 = pneg %p410
        %p726 = pneg %p434
        %p727 = pneg %p431
        %p728 = pneg %p462
        %p729 = pneg %p459
        %s730 = sand.u32 %s449, 1
        %s731 = scalar_lea.sflag [#allocation5], %s730
        %s732 = sand.u32 %s449, 1
        %s733 = smul.addr %s732, 8
        %s734 = scalar_lea.vmem [#allocation17], %s733
        %p735 = scmp.eq.s32.totalorder %s47, 0
        // Predicated region
        $region121: #{tpu_custom_call.1} parent=87 // pred_check
          %p736 = pneg %p735
        $region122: #{tpu_custom_call.1} parent=87 // pred_check_branch
          %738 = sbr.rel (%p736) target = $region124
        $region123: #{tpu_custom_call.1} parent=87 // pred_region
          %vm739 = vcmask 261120
          %740 = vst.msk [vmem:[#allocation2] sm:$0xff] %vm739, 0.0
        $region124: #{tpu_custom_call.1} parent=87 // pred_fallthru
          _
        %v741 = vld [vmem:[%s636] sm:$0xff]
        %v742 = vlaneseq
        %v743 = vshrl.u32 %v742, 7
        %v744 = vsub.s32 0, %v743
        %v745 = vrot.slane %v741, %v744
        %747 = vbcast.lane.b32.xlu0 %v745, 256
        %v748 = vpop.permute.xlu0 %747
        %v749 = vlaneseq
        %v750 = vshrl.u32 %v749, 7
        %v751 = vsub.s32 1, %v750
        %v752 = vrot.slane %v741, %v751
        %754 = vbcast.lane.b32.xlu0 %v752, 256
        %v755 = vpop.permute.xlu0 %754
        %v756 = vlaneseq
        %v757 = vshrl.u32 %v756, 7
        %v758 = vsub.s32 2, %v757
        %v759 = vrot.slane %v741, %v758
        %761 = vbcast.lane.b32.xlu0 %v759, 256
        %v762 = vpop.permute.xlu0 %761
        %v763 = vlaneseq
        %v764 = vshrl.u32 %v763, 7
        %v765 = vsub.s32 3, %v764
        %v766 = vrot.slane %v741, %v765
        %768 = vbcast.lane.b32.xlu0 %v766, 256
        %v769 = vpop.permute.xlu0 %768
        %v770 = vlaneseq
        %v771 = vshrl.u32 %v770, 7
        %v772 = vsub.s32 4, %v771
        %v773 = vrot.slane %v741, %v772
        %775 = vbcast.lane.b32.xlu0 %v773, 256
        %v776 = vpop.permute.xlu0 %775
        %v777 = vlaneseq
        %v778 = vshrl.u32 %v777, 7
        %v779 = vsub.s32 5, %v778
        %v780 = vrot.slane %v741, %v779
        %782 = vbcast.lane.b32.xlu0 %v780, 256
        %v783 = vpop.permute.xlu0 %782
        %v784 = vlaneseq
        %v785 = vshrl.u32 %v784, 7
        %v786 = vsub.s32 6, %v785
        %v787 = vrot.slane %v741, %v786
        %789 = vbcast.lane.b32.xlu0 %v787, 256
        %v790 = vpop.permute.xlu0 %789
        %v791 = vlaneseq
        %v792 = vshrl.u32 %v791, 7
        %v793 = vsub.s32 7, %v792
        %v794 = vrot.slane %v741, %v793
        %796 = vbcast.lane.b32.xlu0 %v794, 256
        %v797 = vpop.permute.xlu0 %796
        %v798 = vld [vmem:[%s3] sm:$0x1]
        %v800 = vlaneseq
        %v801 = vshrl.u32 %v800, 7
        %v802 = vsub.s32 0, %v801
        %v803 = vrot.slane %v798, %v802
        %v805 = vmul.f32 %v748, %v803
        %v806 = vmul.f32 %v755, %v803
        %v807 = vmul.f32 %v762, %v803
        %v808 = vmul.f32 %v769, %v803
        %v809 = vmul.f32 %v776, %v803
        %v810 = vmul.f32 %v783, %v803
        %v811 = vmul.f32 %v790, %v803
        %v812 = vmul.f32 %v797, %v803
        %v813 = vld [vmem:[%s4] sm:$0x1]
        %v815 = vlaneseq
        %v816 = vshrl.u32 %v815, 7
        %v817 = vsub.s32 0, %v816
        %v818 = vrot.slane %v813, %v817
        %v820 = vadd.f32 %v805, %v818
        %v821 = vadd.f32 %v806, %v818
        %v822 = vadd.f32 %v807, %v818
        %v823 = vadd.f32 %v808, %v818
        %v824 = vadd.f32 %v809, %v818
        %v825 = vadd.f32 %v810, %v818
        %v826 = vadd.f32 %v811, %v818
        %v827 = vadd.f32 %v812, %v818
        %v828 = vmul.f32 %v820, 0.5
        %v829 = vmul.f32 %v821, 0.5
        %v830 = vmul.f32 %v822, 0.5
        %v831 = vmul.f32 %v823, 0.5
        %v832 = vmul.f32 %v824, 0.5
        %v833 = vmul.f32 %v825, 0.5
        %v834 = vmul.f32 %v826, 0.5
        %v835 = vmul.f32 %v827, 0.5
        %v836 = vtanh.pop %v828
        %v837 = vtanh.pop %v829
        %v838 = vtanh.pop %v830
        %v839 = vtanh.pop %v831
        %v840 = vtanh.pop %v832
        %v841 = vtanh.pop %v833
        %v842 = vtanh.pop %v834
        %v843 = vtanh.pop %v835
        %v844 = vmul.f32 %v828, %v836
        %v845 = vmul.f32 %v829, %v837
        %v846 = vmul.f32 %v830, %v838
        %v847 = vmul.f32 %v831, %v839
        %v848 = vmul.f32 %v832, %v840
        %v849 = vmul.f32 %v833, %v841
        %v850 = vmul.f32 %v834, %v842
        %v851 = vmul.f32 %v835, %v843
        %v852 = vadd.f32 %v844, %v828
        %v853 = vadd.f32 %v845, %v829
        %v854 = vadd.f32 %v846, %v830
        %v855 = vadd.f32 %v847, %v831
        %v856 = vadd.f32 %v848, %v832
        %v857 = vadd.f32 %v849, %v833
        %v858 = vadd.f32 %v850, %v834
        %v859 = vadd.f32 %v851, %v835
        %v860 = vld [vmem:[#allocation9] sm:$0x1]
        %vm861 = vcmask 523264
        %v862 = vsel %vm861, %v852, 0.0
        %863 = vadd.xlane.f32.xlu0 %v862
        %v864 = vpop.xlane.xlu0 %863
        %v865 = vsel %vm861, %v853, 0.0
        %866 = vadd.xlane.f32.xlu0 %v865
        %v867 = vpop.xlane.xlu0 %866
        %v868 = vsel %vm861, %v854, 0.0
        %869 = vadd.xlane.f32.xlu0 %v868
        %v870 = vpop.xlane.xlu0 %869
        %v871 = vsel %vm861, %v855, 0.0
        %872 = vadd.xlane.f32.xlu0 %v871
        %v873 = vpop.xlane.xlu0 %872
        %v874 = vsel %vm861, %v856, 0.0
        %875 = vadd.xlane.f32.xlu0 %v874
        %v876 = vpop.xlane.xlu0 %875
        %v877 = vsel %vm861, %v857, 0.0
        %878 = vadd.xlane.f32.xlu0 %v877
        %v879 = vpop.xlane.xlu0 %878
        %v880 = vsel %vm861, %v858, 0.0
        %881 = vadd.xlane.f32.xlu0 %v880
        %v882 = vpop.xlane.xlu0 %881
        %v883 = vsel %vm861, %v859, 0.0
        %884 = vadd.xlane.f32.xlu0 %v883
        %v885 = vpop.xlane.xlu0 %884
        %v886 = vrcp.pop 64.0
        %v887 = vmul.f32 %v864, %v886
        %v888 = vmul.f32 %v867, %v886
        %v889 = vmul.f32 %v870, %v886
        %v890 = vmul.f32 %v873, %v886
        %v891 = vmul.f32 %v876, %v886
        %v892 = vmul.f32 %v879, %v886
        %v893 = vmul.f32 %v882, %v886
        %v894 = vmul.f32 %v885, %v886
        %v895 = vmul.f32 %v852, %v852
        %v896 = vmul.f32 %v853, %v853
        %v897 = vmul.f32 %v854, %v854
        %v898 = vmul.f32 %v855, %v855
        %v899 = vmul.f32 %v856, %v856
        %v900 = vmul.f32 %v857, %v857
        %v901 = vmul.f32 %v858, %v858
        %v902 = vmul.f32 %v859, %v859
        %v903 = vsel %vm861, %v895, 0.0
        %904 = vadd.xlane.f32.xlu0 %v903
        %v905 = vpop.xlane.xlu0 %904
        %v906 = vsel %vm861, %v896, 0.0
        %907 = vadd.xlane.f32.xlu0 %v906
        %v908 = vpop.xlane.xlu0 %907
        %v909 = vsel %vm861, %v897, 0.0
        %910 = vadd.xlane.f32.xlu0 %v909
        %v911 = vpop.xlane.xlu0 %910
        %v912 = vsel %vm861, %v898, 0.0
        %913 = vadd.xlane.f32.xlu0 %v912
        %v914 = vpop.xlane.xlu0 %913
        %v915 = vsel %vm861, %v899, 0.0
        %916 = vadd.xlane.f32.xlu0 %v915
        %v917 = vpop.xlane.xlu0 %916
        %v918 = vsel %vm861, %v900, 0.0
        %919 = vadd.xlane.f32.xlu0 %v918
        %v920 = vpop.xlane.xlu0 %919
        %v921 = vsel %vm861, %v901, 0.0
        %922 = vadd.xlane.f32.xlu0 %v921
        %v923 = vpop.xlane.xlu0 %922
        %v924 = vsel %vm861, %v902, 0.0
        %925 = vadd.xlane.f32.xlu0 %v924
        %v926 = vpop.xlane.xlu0 %925
        %v927 = vmul.f32 %v905, %v886
        %v928 = vmul.f32 %v908, %v886
        %v929 = vmul.f32 %v911, %v886
        %v930 = vmul.f32 %v914, %v886
        %v931 = vmul.f32 %v917, %v886
        %v932 = vmul.f32 %v920, %v886
        %v933 = vmul.f32 %v923, %v886
        %v934 = vmul.f32 %v926, %v886
        %v935 = vmul.f32 %v887, %v887
        %v936 = vmul.f32 %v888, %v888
        %v937 = vmul.f32 %v889, %v889
        %v938 = vmul.f32 %v890, %v890
        %v939 = vmul.f32 %v891, %v891
        %v940 = vmul.f32 %v892, %v892
        %v941 = vmul.f32 %v893, %v893
        %v942 = vmul.f32 %v894, %v894
        %v943 = vsub.f32 %v927, %v935
        %v944 = vsub.f32 %v928, %v936
        %v945 = vsub.f32 %v929, %v937
        %v946 = vsub.f32 %v930, %v938
        %v947 = vsub.f32 %v931, %v939
        %v948 = vsub.f32 %v932, %v940
        %v949 = vsub.f32 %v933, %v941
        %v950 = vsub.f32 %v934, %v942
        %v951 = vadd.f32 %v943, 1e-05
        %v952 = vadd.f32 %v944, 1e-05
        %v953 = vadd.f32 %v945, 1e-05
        %v954 = vadd.f32 %v946, 1e-05
        %v955 = vadd.f32 %v947, 1e-05
        %v956 = vadd.f32 %v948, 1e-05
        %v957 = vadd.f32 %v949, 1e-05
        %v958 = vadd.f32 %v950, 1e-05
        %v959 = vrsqrt.pop %v951
        %v960 = vrsqrt.pop %v952
        %v961 = vrsqrt.pop %v953
        %v962 = vrsqrt.pop %v954
        %v963 = vrsqrt.pop %v955
        %v964 = vrsqrt.pop %v956
        %v965 = vrsqrt.pop %v957
        %v966 = vrsqrt.pop %v958
        %v967 = vsub.f32 %v852, %v887
        %v968 = vsub.f32 %v853, %v888
        %v969 = vsub.f32 %v854, %v889
        %v970 = vsub.f32 %v855, %v890
        %v971 = vsub.f32 %v856, %v891
        %v972 = vsub.f32 %v857, %v892
        %v973 = vsub.f32 %v858, %v893
        %v974 = vsub.f32 %v859, %v894
        %v975 = vmul.f32 %v967, %v959
        %v976 = vmul.f32 %v968, %v960
        %v977 = vmul.f32 %v969, %v961
        %v978 = vmul.f32 %v970, %v962
        %v979 = vmul.f32 %v971, %v963
        %v980 = vmul.f32 %v972, %v964
        %v981 = vmul.f32 %v973, %v965
        %v982 = vmul.f32 %v974, %v966
        %v984 = vlaneseq
        %v985 = vshrl.u32 %v984, 7
        %v986 = vsub.s32 0, %v985
        %v987 = vrot.slane %v860, %v986
        %v989 = vmul.f32 %v975, %v987
        %v990 = vmul.f32 %v976, %v987
        %v991 = vmul.f32 %v977, %v987
        %v992 = vmul.f32 %v978, %v987
        %v993 = vmul.f32 %v979, %v987
        %v994 = vmul.f32 %v980, %v987
        %v995 = vmul.f32 %v981, %v987
        %v996 = vmul.f32 %v982, %v987
        %v997 = vld [vmem:[%s6] sm:$0xff]
        %v998 = vld [vmem:[%s6 + $0x8] sm:$0xff]
        %v999 = vld [vmem:[%s6 + $0x10] sm:$0xff]
        %v1000 = vld [vmem:[%s6 + $0x18] sm:$0xff]
        %v1001 = vld [vmem:[%s6 + $0x20] sm:$0xff]
        %v1002 = vld [vmem:[%s6 + $0x28] sm:$0xff]
        %v1003 = vld [vmem:[%s6 + $0x30] sm:$0xff]
        %v1004 = vld [vmem:[%s6 + $0x38] sm:$0xff]
        %v1005 = vld [vmem:[#allocation11] sm:$0x1]
        %v1007 = vlaneseq
        %v1008 = vshrl.u32 %v1007, 7
        %v1009 = vsub.s32 0, %v1008
        %v1010 = vrot.slane %v1005, %v1009
        %v1013 = vsel %vm861, %v989, 0
        %v1016 = vsel %vm861, %v990, 0
        %v1019 = vsel %vm861, %v991, 0
        %v1022 = vsel %vm861, %v992, 0
        %v1025 = vsel %vm861, %v993, 0
        %v1028 = vsel %vm861, %v994, 0
        %v1031 = vsel %vm861, %v995, 0
        %v1034 = vsel %vm861, %v996, 0
        %1036 = vmatprep.subr.mxu0 0.0
        %1037 = vmatpush1.msra.mxu0 %v997
        %1038 = vmatprep.subr.mxu0 0.0
        %1039 = vmatpush1.msra.mxu0 %v998
        %1040 = vmatprep.subr.mxu0 0.0
        %1041 = vmatpush1.msra.mxu0 %v999
        %1042 = vmatprep.subr.mxu0 0.0
        %1043 = vmatpush1.msra.mxu0 %v1000
        %1044 = vmatprep.subr.mxu0 0.0
        %1045 = vmatpush1.msra.mxu0 %v1001
        %1046 = vmatprep.subr.mxu0 0.0
        %1047 = vmatpush1.msra.mxu0 %v1002
        %1048 = vmatprep.subr.mxu0 0.0
        %1049 = vmatpush1.msra.mxu0 %v1003
        %1050 = vmatprep.subr.mxu0 0.0
        %1051 = vmatpush1.msra.mxu0 %v1004
        %1052 = vmatprep.subr.mxu0 0.0
        %1053 = vmatpush1.msra.mxu0 0.0
        %1054 = vmatprep.subr.mxu0 0.0
        %1055 = vmatpush1.msra.mxu0 0.0
        %1056 = vmatprep.subr.mxu0 0.0
        %1057 = vmatpush1.msra.mxu0 0.0
        %1058 = vmatprep.subr.mxu0 0.0
        %1059 = vmatpush1.msra.mxu0 0.0
        %1060 = vmatprep.subr.mxu0 0.0
        %1061 = vmatpush1.msra.mxu0 0.0
        %1062 = vmatprep.subr.mxu0 0.0
        %1063 = vmatpush1.msra.mxu0 0.0
        %1064 = vmatprep.subr.mxu0 0.0
        %1065 = vmatpush1.msra.mxu0 0.0
        %1066 = vmatprep.subr.mxu0 0.0
        %1067 = vmatpush1.msra.mxu0 0.0
        %1068 = vmatprep.subr.mxu0 0.0
        %1069 = vmatpush1.msra.mxu0 0.0
        %1070 = vmatprep.subr.mxu0 0.0
        %1071 = vmatpush1.msra.mxu0 0.0
        %1072 = vmatprep.subr.mxu0 0.0
        %1073 = vmatpush1.msra.mxu0 0.0
        %1074 = vmatprep.subr.mxu0 0.0
        %1075 = vmatpush1.msra.mxu0 0.0
        %1076 = vmatprep.subr.mxu0 0.0
        %1077 = vmatpush1.msra.mxu0 0.0
        %1078 = vmatprep.subr.mxu0 0.0
        %1079 = vmatpush1.msra.mxu0 0.0
        %1080 = vmatprep.subr.mxu0 0.0
        %1081 = vmatpush1.msra.mxu0 0.0
        %1082 = vmatprep.subr.mxu0 0.0
        %1083 = vmatpush1.msra.mxu0 0.0
        %1084 = vmatprep.subr.mxu0 0.0
        %1085 = vmatpush1.msra.mxu0 0.0
        %1086 = vmatprep.subr.mxu0 0.0
        %1087 = vmatpush1.msra.mxu0 0.0
        %1088 = vmatprep.subr.mxu0 0.0
        %1089 = vmatpush1.msra.mxu0 0.0
        %1090 = vmatprep.subr.mxu0 0.0
        %1091 = vmatpush1.msra.mxu0 0.0
        %1092 = vmatprep.subr.mxu0 0.0
        %1093 = vmatpush1.msra.mxu0 0.0
        %1094 = vmatprep.subr.mxu0 0.0
        %1095 = vmatpush1.msra.mxu0 0.0
        %1096 = vmatprep.subr.mxu0 0.0
        %1097 = vmatpush1.msra.mxu0 0.0
        %1098 = vmatprep.subr.mxu0 0.0
        %1099 = vmatpush1.msra.mxu0 0.0
        %1100 = vmatprep.mubr.f32.mxu0 0.0
        %1101 = vmatmul.mubr.f32.gmra.mrb[0].mxu0 %v1013
        %v1102 = vpop.f32.mrb[0].mxu0
        %v1103 = vadd.f32 %v1010, %v1102
        %v1104 = vpop.f32.mrb[0].mxu0
        %1105 = vmatprep.mubr.f32.mxu0 0.0
        %1106 = vmatmul.mubr.f32.gmra.mrb[0].mxu0 %v1016
        %v1107 = vpop.f32.mrb[0].mxu0
        %v1108 = vadd.f32 %v1010, %v1107
        %v1109 = vpop.f32.mrb[0].mxu0
        %1110 = vmatprep.mubr.f32.mxu0 0.0
        %1111 = vmatmul.mubr.f32.gmra.mrb[0].mxu0 %v1019
        %v1112 = vpop.f32.mrb[0].mxu0
        %v1113 = vadd.f32 %v1010, %v1112
        %v1114 = vpop.f32.mrb[0].mxu0
        %1115 = vmatprep.mubr.f32.mxu0 0.0
        %1116 = vmatmul.mubr.f32.gmra.mrb[0].mxu0 %v1022
        %v1117 = vpop.f32.mrb[0].mxu0
        %v1118 = vadd.f32 %v1010, %v1117
        %v1119 = vpop.f32.mrb[0].mxu0
        %1120 = vmatprep.mubr.f32.mxu0 0.0
        %1121 = vmatmul.mubr.f32.gmra.mrb[0].mxu0 %v1025
        %v1122 = vpop.f32.mrb[0].mxu0
        %v1123 = vadd.f32 %v1010, %v1122
        %v1124 = vpop.f32.mrb[0].mxu0
        %1125 = vmatprep.mubr.f32.mxu0 0.0
        %1126 = vmatmul.mubr.f32.gmra.mrb[0].mxu0 %v1028
        %v1127 = vpop.f32.mrb[0].mxu0
        %v1128 = vadd.f32 %v1010, %v1127
        %v1129 = vpop.f32.mrb[0].mxu0
        %1130 = vmatprep.mubr.f32.mxu0 0.0
        %1131 = vmatmul.mubr.f32.gmra.mrb[0].mxu0 %v1031
        %v1132 = vpop.f32.mrb[0].mxu0
        %v1133 = vadd.f32 %v1010, %v1132
        %v1134 = vpop.f32.mrb[0].mxu0
        %1135 = vmatprep.mubr.f32.mxu0 0.0
        %1136 = vmatmul.mubr.f32.gmra.mrb[0].mxu0 %v1034
        %v1137 = vpop.f32.mrb[0].mxu0
        %v1138 = vadd.f32 %v1010, %v1137
        %v1139 = vpop.f32.mrb[0].mxu0
        %1140 = vdwg.mxu0
        %v1141 = vmul.f32 %v1103, 0.5
        %v1142 = vmul.f32 %v1108, 0.5
        %v1143 = vmul.f32 %v1113, 0.5
        %v1144 = vmul.f32 %v1118, 0.5
        %v1145 = vmul.f32 %v1123, 0.5
        %v1146 = vmul.f32 %v1128, 0.5
        %v1147 = vmul.f32 %v1133, 0.5
        %v1148 = vmul.f32 %v1138, 0.5
        %v1149 = vtanh.pop %v1141
        %v1150 = vtanh.pop %v1142
        %v1151 = vtanh.pop %v1143
        %v1152 = vtanh.pop %v1144
        %v1153 = vtanh.pop %v1145
        %v1154 = vtanh.pop %v1146
        %v1155 = vtanh.pop %v1147
        %v1156 = vtanh.pop %v1148
        %v1157 = vmul.f32 %v1141, %v1149
        %v1158 = vmul.f32 %v1142, %v1150
        %v1159 = vmul.f32 %v1143, %v1151
        %v1160 = vmul.f32 %v1144, %v1152
        %v1161 = vmul.f32 %v1145, %v1153
        %v1162 = vmul.f32 %v1146, %v1154
        %v1163 = vmul.f32 %v1147, %v1155
        %v1164 = vmul.f32 %v1148, %v1156
        %v1165 = vadd.f32 %v1157, %v1141
        %v1166 = vadd.f32 %v1158, %v1142
        %v1167 = vadd.f32 %v1159, %v1143
        %v1168 = vadd.f32 %v1160, %v1144
        %v1169 = vadd.f32 %v1161, %v1145
        %v1170 = vadd.f32 %v1162, %v1146
        %v1171 = vadd.f32 %v1163, %v1147
        %v1172 = vadd.f32 %v1164, %v1148
        %v1173 = vld [vmem:[#allocation12] sm:$0x1]
        %v1174 = vsel %vm861, %v1165, 0.0
        %1175 = vadd.xlane.f32.xlu0 %v1174
        %v1176 = vpop.xlane.xlu0 %1175
        %v1177 = vsel %vm861, %v1166, 0.0
        %1178 = vadd.xlane.f32.xlu0 %v1177
        %v1179 = vpop.xlane.xlu0 %1178
        %v1180 = vsel %vm861, %v1167, 0.0
        %1181 = vadd.xlane.f32.xlu0 %v1180
        %v1182 = vpop.xlane.xlu0 %1181
        %v1183 = vsel %vm861, %v1168, 0.0
        %1184 = vadd.xlane.f32.xlu0 %v1183
        %v1185 = vpop.xlane.xlu0 %1184
        %v1186 = vsel %vm861, %v1169, 0.0
        %1187 = vadd.xlane.f32.xlu0 %v1186
        %v1188 = vpop.xlane.xlu0 %1187
        %v1189 = vsel %vm861, %v1170, 0.0
        %1190 = vadd.xlane.f32.xlu0 %v1189
        %v1191 = vpop.xlane.xlu0 %1190
        %v1192 = vsel %vm861, %v1171, 0.0
        %1193 = vadd.xlane.f32.xlu0 %v1192
        %v1194 = vpop.xlane.xlu0 %1193
        %v1195 = vsel %vm861, %v1172, 0.0
        %1196 = vadd.xlane.f32.xlu0 %v1195
        %v1197 = vpop.xlane.xlu0 %1196
        %v1198 = vmul.f32 %v1176, %v886
        %v1199 = vmul.f32 %v1179, %v886
        %v1200 = vmul.f32 %v1182, %v886
        %v1201 = vmul.f32 %v1185, %v886
        %v1202 = vmul.f32 %v1188, %v886
        %v1203 = vmul.f32 %v1191, %v886
        %v1204 = vmul.f32 %v1194, %v886
        %v1205 = vmul.f32 %v1197, %v886
        %v1206 = vmul.f32 %v1165, %v1165
        %v1207 = vmul.f32 %v1166, %v1166
        %v1208 = vmul.f32 %v1167, %v1167
        %v1209 = vmul.f32 %v1168, %v1168
        %v1210 = vmul.f32 %v1169, %v1169
        %v1211 = vmul.f32 %v1170, %v1170
        %v1212 = vmul.f32 %v1171, %v1171
        %v1213 = vmul.f32 %v1172, %v1172
        %v1214 = vsel %vm861, %v1206, 0.0
        %1215 = vadd.xlane.f32.xlu0 %v1214
        %v1216 = vpop.xlane.xlu0 %1215
        %v1217 = vsel %vm861, %v1207, 0.0
        %1218 = vadd.xlane.f32.xlu0 %v1217
        %v1219 = vpop.xlane.xlu0 %1218
        %v1220 = vsel %vm861, %v1208, 0.0
        %1221 = vadd.xlane.f32.xlu0 %v1220
        %v1222 = vpop.xlane.xlu0 %1221
        %v1223 = vsel %vm861, %v1209, 0.0
        %1224 = vadd.xlane.f32.xlu0 %v1223
        %v1225 = vpop.xlane.xlu0 %1224
        %v1226 = vsel %vm861, %v1210, 0.0
        %1227 = vadd.xlane.f32.xlu0 %v1226
        %v1228 = vpop.xlane.xlu0 %1227
        %v1229 = vsel %vm861, %v1211, 0.0
        %1230 = vadd.xlane.f32.xlu0 %v1229
        %v1231 = vpop.xlane.xlu0 %1230
        %v1232 = vsel %vm861, %v1212, 0.0
        %1233 = vadd.xlane.f32.xlu0 %v1232
        %v1234 = vpop.xlane.xlu0 %1233
        %v1235 = vsel %vm861, %v1213, 0.0
        %1236 = vadd.xlane.f32.xlu0 %v1235
        %v1237 = vpop.xlane.xlu0 %1236
        %v1238 = vmul.f32 %v1216, %v886
        %v1239 = vmul.f32 %v1219, %v886
        %v1240 = vmul.f32 %v1222, %v886
        %v1241 = vmul.f32 %v1225, %v886
        %v1242 = vmul.f32 %v1228, %v886
        %v1243 = vmul.f32 %v1231, %v886
        %v1244 = vmul.f32 %v1234, %v886
        %v1245 = vmul.f32 %v1237, %v886
        %v1246 = vmul.f32 %v1198, %v1198
        %v1247 = vmul.f32 %v1199, %v1199
        %v1248 = vmul.f32 %v1200, %v1200
        %v1249 = vmul.f32 %v1201, %v1201
        %v1250 = vmul.f32 %v1202, %v1202
        %v1251 = vmul.f32 %v1203, %v1203
        %v1252 = vmul.f32 %v1204, %v1204
        %v1253 = vmul.f32 %v1205, %v1205
        %v1254 = vsub.f32 %v1238, %v1246
        %v1255 = vsub.f32 %v1239, %v1247
        %v1256 = vsub.f32 %v1240, %v1248
        %v1257 = vsub.f32 %v1241, %v1249
        %v1258 = vsub.f32 %v1242, %v1250
        %v1259 = vsub.f32 %v1243, %v1251
        %v1260 = vsub.f32 %v1244, %v1252
        %v1261 = vsub.f32 %v1245, %v1253
        %v1262 = vadd.f32 %v1254, 1e-05
        %v1263 = vadd.f32 %v1255, 1e-05
        %v1264 = vadd.f32 %v1256, 1e-05
        %v1265 = vadd.f32 %v1257, 1e-05
        %v1266 = vadd.f32 %v1258, 1e-05
        %v1267 = vadd.f32 %v1259, 1e-05
        %v1268 = vadd.f32 %v1260, 1e-05
        %v1269 = vadd.f32 %v1261, 1e-05
        %v1270 = vrsqrt.pop %v1262
        %v1271 = vrsqrt.pop %v1263
        %v1272 = vrsqrt.pop %v1264
        %v1273 = vrsqrt.pop %v1265
        %v1274 = vrsqrt.pop %v1266
        %v1275 = vrsqrt.pop %v1267
        %v1276 = vrsqrt.pop %v1268
        %v1277 = vrsqrt.pop %v1269
        %v1278 = vsub.f32 %v1165, %v1198
        %v1279 = vsub.f32 %v1166, %v1199
        %v1280 = vsub.f32 %v1167, %v1200
        %v1281 = vsub.f32 %v1168, %v1201
        %v1282 = vsub.f32 %v1169, %v1202
        %v1283 = vsub.f32 %v1170, %v1203
        %v1284 = vsub.f32 %v1171, %v1204
        %v1285 = vsub.f32 %v1172, %v1205
        %v1286 = vmul.f32 %v1278, %v1270
        %v1287 = vmul.f32 %v1279, %v1271
        %v1288 = vmul.f32 %v1280, %v1272
        %v1289 = vmul.f32 %v1281, %v1273
        %v1290 = vmul.f32 %v1282, %v1274
        %v1291 = vmul.f32 %v1283, %v1275
        %v1292 = vmul.f32 %v1284, %v1276
        %v1293 = vmul.f32 %v1285, %v1277
        %v1295 = vlaneseq
        %v1296 = vshrl.u32 %v1295, 7
        %v1297 = vsub.s32 0, %v1296
        %v1298 = vrot.slane %v1173, %v1297
        %v1300 = vmul.f32 %v1286, %v1298
        %v1301 = vmul.f32 %v1287, %v1298
        %v1302 = vmul.f32 %v1288, %v1298
        %v1303 = vmul.f32 %v1289, %v1298
        %v1304 = vmul.f32 %v1290, %v1298
        %v1305 = vmul.f32 %v1291, %v1298
        %v1306 = vmul.f32 %v1292, %v1298
        %v1307 = vmul.f32 %v1293, %v1298
        %v1308 = vld [vmem:[%s9] sm:$0xff]
        %v1309 = vld [vmem:[%s9 + $0x8] sm:$0xff]
        %v1310 = vld [vmem:[%s9 + $0x10] sm:$0xff]
        %v1311 = vld [vmem:[%s9 + $0x18] sm:$0xff]
        %v1312 = vld [vmem:[%s9 + $0x20] sm:$0xff]
        %v1313 = vld [vmem:[%s9 + $0x28] sm:$0xff]
        %v1314 = vld [vmem:[%s9 + $0x30] sm:$0xff]
        %v1315 = vld [vmem:[%s9 + $0x38] sm:$0xff]
        %v1316 = vld [vmem:[%s10] sm:$0x1]
        %v1318 = vlaneseq
        %v1319 = vshrl.u32 %v1318, 7
        %v1320 = vsub.s32 0, %v1319
        %v1321 = vrot.slane %v1316, %v1320
        %v1324 = vsel %vm861, %v1300, 0
        %v1327 = vsel %vm861, %v1301, 0
        %v1330 = vsel %vm861, %v1302, 0
        %v1333 = vsel %vm861, %v1303, 0
        %v1336 = vsel %vm861, %v1304, 0
        %v1339 = vsel %vm861, %v1305, 0
        %v1342 = vsel %vm861, %v1306, 0
        %v1345 = vsel %vm861, %v1307, 0
        %1347 = vmatprep.subr.mxu0 0.0
        %1348 = vmatpush1.msra.mxu0 %v1308
        %1349 = vmatprep.subr.mxu0 0.0
        %1350 = vmatpush1.msra.mxu0 %v1309
        %1351 = vmatprep.subr.mxu0 0.0
        %1352 = vmatpush1.msra.mxu0 %v1310
        %1353 = vmatprep.subr.mxu0 0.0
        %1354 = vmatpush1.msra.mxu0 %v1311
        %1355 = vmatprep.subr.mxu0 0.0
        %1356 = vmatpush1.msra.mxu0 %v1312
        %1357 = vmatprep.subr.mxu0 0.0
        %1358 = vmatpush1.msra.mxu0 %v1313
        %1359 = vmatprep.subr.mxu0 0.0
        %1360 = vmatpush1.msra.mxu0 %v1314
        %1361 = vmatprep.subr.mxu0 0.0
        %1362 = vmatpush1.msra.mxu0 %v1315
        %1363 = vmatprep.subr.mxu0 0.0
        %1364 = vmatpush1.msra.mxu0 0.0
        %1365 = vmatprep.subr.mxu0 0.0
        %1366 = vmatpush1.msra.mxu0 0.0
        %1367 = vmatprep.subr.mxu0 0.0
        %1368 = vmatpush1.msra.mxu0 0.0
        %1369 = vmatprep.subr.mxu0 0.0
        %1370 = vmatpush1.msra.mxu0 0.0
        %1371 = vmatprep.subr.mxu0 0.0
        %1372 = vmatpush1.msra.mxu0 0.0
        %1373 = vmatprep.subr.mxu0 0.0
        %1374 = vmatpush1.msra.mxu0 0.0
        %1375 = vmatprep.subr.mxu0 0.0
        %1376 = vmatpush1.msra.mxu0 0.0
        %1377 = vmatprep.subr.mxu0 0.0
        %1378 = vmatpush1.msra.mxu0 0.0
        %1379 = vmatprep.subr.mxu0 0.0
        %1380 = vmatpush1.msra.mxu0 0.0
        %1381 = vmatprep.subr.mxu0 0.0
        %1382 = vmatpush1.msra.mxu0 0.0
        %1383 = vmatprep.subr.mxu0 0.0
        %1384 = vmatpush1.msra.mxu0 0.0
        %1385 = vmatprep.subr.mxu0 0.0
        %1386 = vmatpush1.msra.mxu0 0.0
        %1387 = vmatprep.subr.mxu0 0.0
        %1388 = vmatpush1.msra.mxu0 0.0
        %1389 = vmatprep.subr.mxu0 0.0
        %1390 = vmatpush1.msra.mxu0 0.0
        %1391 = vmatprep.subr.mxu0 0.0
        %1392 = vmatpush1.msra.mxu0 0.0
        %1393 = vmatprep.subr.mxu0 0.0
        %1394 = vmatpush1.msra.mxu0 0.0
        %1395 = vmatprep.subr.mxu0 0.0
        %1396 = vmatpush1.msra.mxu0 0.0
        %1397 = vmatprep.subr.mxu0 0.0
        %1398 = vmatpush1.msra.mxu0 0.0
        %1399 = vmatprep.subr.mxu0 0.0
        %1400 = vmatpush1.msra.mxu0 0.0
        %1401 = vmatprep.subr.mxu0 0.0
        %1402 = vmatpush1.msra.mxu0 0.0
        %1403 = vmatprep.subr.mxu0 0.0
        %1404 = vmatpush1.msra.mxu0 0.0
        %1405 = vmatprep.subr.mxu0 0.0
        %1406 = vmatpush1.msra.mxu0 0.0
        %1407 = vmatprep.subr.mxu0 0.0
        %1408 = vmatpush1.msra.mxu0 0.0
        %1409 = vmatprep.subr.mxu0 0.0
        %1410 = vmatpush1.msra.mxu0 0.0
        %1411 = vmatprep.mubr.f32.mxu0 0.0
        %1412 = vmatmul.mubr.f32.gmra.mrb[0].mxu0 %v1324
        %v1413 = vpop.f32.mrb[0].mxu0
        %v1414 = vadd.f32 %v1321, %v1413
        %v1415 = vpop.f32.mrb[0].mxu0
        %1416 = vmatprep.mubr.f32.mxu0 0.0
        %1417 = vmatmul.mubr.f32.gmra.mrb[0].mxu0 %v1327
        %v1418 = vpop.f32.mrb[0].mxu0
        %v1419 = vadd.f32 %v1321, %v1418
        %v1420 = vpop.f32.mrb[0].mxu0
        %1421 = vmatprep.mubr.f32.mxu0 0.0
        %1422 = vmatmul.mubr.f32.gmra.mrb[0].mxu0 %v1330
        %v1423 = vpop.f32.mrb[0].mxu0
        %v1424 = vadd.f32 %v1321, %v1423
        %v1425 = vpop.f32.mrb[0].mxu0
        %1426 = vmatprep.mubr.f32.mxu0 0.0
        %1427 = vmatmul.mubr.f32.gmra.mrb[0].mxu0 %v1333
        %v1428 = vpop.f32.mrb[0].mxu0
        %v1429 = vadd.f32 %v1321, %v1428
        %v1430 = vpop.f32.mrb[0].mxu0
        %1431 = vmatprep.mubr.f32.mxu0 0.0
        %1432 = vmatmul.mubr.f32.gmra.mrb[0].mxu0 %v1336
        %v1433 = vpop.f32.mrb[0].mxu0
        %v1434 = vadd.f32 %v1321, %v1433
        %v1435 = vpop.f32.mrb[0].mxu0
        %1436 = vmatprep.mubr.f32.mxu0 0.0
        %1437 = vmatmul.mubr.f32.gmra.mrb[0].mxu0 %v1339
        %v1438 = vpop.f32.mrb[0].mxu0
        %v1439 = vadd.f32 %v1321, %v1438
        %v1440 = vpop.f32.mrb[0].mxu0
        %1441 = vmatprep.mubr.f32.mxu0 0.0
        %1442 = vmatmul.mubr.f32.gmra.mrb[0].mxu0 %v1342
        %v1443 = vpop.f32.mrb[0].mxu0
        %v1444 = vadd.f32 %v1321, %v1443
        %v1445 = vpop.f32.mrb[0].mxu0
        %1446 = vmatprep.mubr.f32.mxu0 0.0
        %1447 = vmatmul.mubr.f32.gmra.mrb[0].mxu0 %v1345
        %v1448 = vpop.f32.mrb[0].mxu0
        %v1449 = vadd.f32 %v1321, %v1448
        %v1450 = vpop.f32.mrb[0].mxu0
        %1451 = vdwg.mxu0
        %v1452 = vld [vmem:[%s654] sm:$0xff]
        %v1453 = vld [vmem:[#allocation2] sm:$0xff]
        %v1454 = vmul.f32 %v1414, %v1452
        %v1455 = vmul.f32 %v1419, %v1452
        %v1456 = vmul.f32 %v1424, %v1452
        %v1457 = vmul.f32 %v1429, %v1452
        %v1458 = vmul.f32 %v1434, %v1452
        %v1459 = vmul.f32 %v1439, %v1452
        %v1460 = vmul.f32 %v1444, %v1452
        %v1461 = vmul.f32 %v1449, %v1452
        %vm1462 = vcmask 261120
        %v1463 = vsel %vm1462, %v1454, 0.0
        %v1464 = vrot.slane %v1463, 4
        %v1465 = vadd.f32 %v1463, %v1464
        %v1466 = vrot.slane %v1465, 2
        %v1467 = vadd.f32 %v1465, %v1466
        %v1468 = vrot.slane %v1467, 1
        %v1469 = vadd.f32 %v1467, %v1468
        %v1470 = vsel %vm1462, %v1455, 0.0
        %v1471 = vrot.slane %v1470, 4
        %v1472 = vadd.f32 %v1470, %v1471
        %v1473 = vrot.slane %v1472, 2
        %v1474 = vadd.f32 %v1472, %v1473
        %v1475 = vrot.slane %v1474, 1
        %v1476 = vadd.f32 %v1474, %v1475
        %v1477 = vsel %vm1462, %v1456, 0.0
        %v1478 = vrot.slane %v1477, 4
        %v1479 = vadd.f32 %v1477, %v1478
        %v1480 = vrot.slane %v1479, 2
        %v1481 = vadd.f32 %v1479, %v1480
        %v1482 = vrot.slane %v1481, 1
        %v1483 = vadd.f32 %v1481, %v1482
        %v1484 = vsel %vm1462, %v1457, 0.0
        %v1485 = vrot.slane %v1484, 4
        %v1486 = vadd.f32 %v1484, %v1485
        %v1487 = vrot.slane %v1486, 2
        %v1488 = vadd.f32 %v1486, %v1487
        %v1489 = vrot.slane %v1488, 1
        %v1490 = vadd.f32 %v1488, %v1489
        %v1491 = vsel %vm1462, %v1458, 0.0
        %v1492 = vrot.slane %v1491, 4
        %v1493 = vadd.f32 %v1491, %v1492
        %v1494 = vrot.slane %v1493, 2
        %v1495 = vadd.f32 %v1493, %v1494
        %v1496 = vrot.slane %v1495, 1
        %v1497 = vadd.f32 %v1495, %v1496
        %v1498 = vsel %vm1462, %v1459, 0.0
        %v1499 = vrot.slane %v1498, 4
        %v1500 = vadd.f32 %v1498, %v1499
        %v1501 = vrot.slane %v1500, 2
        %v1502 = vadd.f32 %v1500, %v1501
        %v1503 = vrot.slane %v1502, 1
        %v1504 = vadd.f32 %v1502, %v1503
        %v1505 = vsel %vm1462, %v1460, 0.0
        %v1506 = vrot.slane %v1505, 4
        %v1507 = vadd.f32 %v1505, %v1506
        %v1508 = vrot.slane %v1507, 2
        %v1509 = vadd.f32 %v1507, %v1508
        %v1510 = vrot.slane %v1509, 1
        %v1511 = vadd.f32 %v1509, %v1510
        %v1512 = vsel %vm1462, %v1461, 0.0
        %v1513 = vrot.slane %v1512, 4
        %v1514 = vadd.f32 %v1512, %v1513
        %v1515 = vrot.slane %v1514, 2
        %v1516 = vadd.f32 %v1514, %v1515
        %v1517 = vrot.slane %v1516, 1
        %v1518 = vadd.f32 %v1516, %v1517
        %vm1527 = vcmask 1041409
        %v1528 = vsel %vm1527, %v1476, %v1469
        %vm1529 = vcmask 1042434
        %v1530 = vsel %vm1529, %v1483, %v1528
        %vm1531 = vcmask 1043459
        %v1532 = vsel %vm1531, %v1490, %v1530
        %vm1533 = vcmask 1044484
        %v1534 = vsel %vm1533, %v1497, %v1532
        %vm1535 = vcmask 1045509
        %v1536 = vsel %vm1535, %v1504, %v1534
        %vm1537 = vcmask 1046534
        %v1538 = vsel %vm1537, %v1511, %v1536
        %vm1539 = vcmask 1047559
        %v1540 = vsel %vm1539, %v1518, %v1538
        %v1542 = vadd.f32 %v1453, %v1540
        %1543 = vst.msk [vmem:[#allocation2] sm:$0xff] %vm1462, %v1542
        // Predicated region
        $region125: #{tpu_custom_call.1} parent=87 // pred_check
          %p1544 = pneg %p735
        $region126: #{tpu_custom_call.1} parent=87 // pred_check_branch
          %1546 = sbr.rel (%p1544) target = $region128
        $region127: #{tpu_custom_call.1} parent=87 // pred_region
          %v1547 = vld [vmem:[%s645] sm:$0xff]
          %v1548 = vld [vmem:[%s11] sm:$0xff]
          %v1549 = vld [vmem:[%s11 + $0x8] sm:$0xff]
          %v1550 = vld [vmem:[%s11 + $0x10] sm:$0xff]
          %v1551 = vld [vmem:[%s11 + $0x18] sm:$0xff]
          %v1552 = vld [vmem:[#allocation2] sm:$0xff]
          %v1553 = vld [vmem:[#allocation14] sm:$0xff]
          %v1554 = vld [vmem:[#allocation14 + $0x8] sm:$0xff]
          %v1555 = vld [vmem:[#allocation14 + $0x10] sm:$0xff]
          %v1556 = vld [vmem:[#allocation14 + $0x18] sm:$0xff]
          %v1558 = vsel %vm1462, %v1552, 0
          %1560 = vmatprep.subr.mxu0 0.0
          %1561 = vmatpush1.msra.mxu0 %v1553
          %1562 = vmatprep.subr.mxu0 0.0
          %1563 = vmatpush1.msra.mxu0 %v1554
          %1564 = vmatprep.subr.mxu0 0.0
          %1565 = vmatpush1.msra.mxu0 %v1555
          %1566 = vmatprep.subr.mxu0 0.0
          %1567 = vmatpush1.msra.mxu0 %v1556
          %1568 = vmatprep.subr.mxu0 0.0
          %1569 = vmatpush1.msra.mxu0 0.0
          %1570 = vmatprep.subr.mxu0 0.0
          %1571 = vmatpush1.msra.mxu0 0.0
          %1572 = vmatprep.subr.mxu0 0.0
          %1573 = vmatpush1.msra.mxu0 0.0
          %1574 = vmatprep.subr.mxu0 0.0
          %1575 = vmatpush1.msra.mxu0 0.0
          %1576 = vmatprep.subr.mxu0 0.0
          %1577 = vmatpush1.msra.mxu0 0.0
          %1578 = vmatprep.subr.mxu0 0.0
          %1579 = vmatpush1.msra.mxu0 0.0
          %1580 = vmatprep.subr.mxu0 0.0
          %1581 = vmatpush1.msra.mxu0 0.0
          %1582 = vmatprep.subr.mxu0 0.0
          %1583 = vmatpush1.msra.mxu0 0.0
          %1584 = vmatprep.subr.mxu0 0.0
          %1585 = vmatpush1.msra.mxu0 0.0
          %1586 = vmatprep.subr.mxu0 0.0
          %1587 = vmatpush1.msra.mxu0 0.0
          %1588 = vmatprep.subr.mxu0 0.0
          %1589 = vmatpush1.msra.mxu0 0.0
          %1590 = vmatprep.subr.mxu0 0.0
          %1591 = vmatpush1.msra.mxu0 0.0
          %1592 = vmatprep.subr.mxu0 0.0
          %1593 = vmatpush1.msra.mxu0 0.0
          %1594 = vmatprep.subr.mxu0 0.0
          %1595 = vmatpush1.msra.mxu0 0.0
          %1596 = vmatprep.subr.mxu0 0.0
          %1597 = vmatpush1.msra.mxu0 0.0
          %1598 = vmatprep.subr.mxu0 0.0
          %1599 = vmatpush1.msra.mxu0 0.0
          %1600 = vmatprep.subr.mxu0 0.0
          %1601 = vmatpush1.msra.mxu0 0.0
          %1602 = vmatprep.subr.mxu0 0.0
          %1603 = vmatpush1.msra.mxu0 0.0
          %1604 = vmatprep.subr.mxu0 0.0
          %1605 = vmatpush1.msra.mxu0 0.0
          %1606 = vmatprep.subr.mxu0 0.0
          %1607 = vmatpush1.msra.mxu0 0.0
          %1608 = vmatprep.subr.mxu0 0.0
          %1609 = vmatpush1.msra.mxu0 0.0
          %1610 = vmatprep.subr.mxu0 0.0
          %1611 = vmatpush1.msra.mxu0 0.0
          %1612 = vmatprep.subr.mxu0 0.0
          %1613 = vmatpush1.msra.mxu0 0.0
          %1614 = vmatprep.subr.mxu0 0.0
          %1615 = vmatpush1.msra.mxu0 0.0
          %1616 = vmatprep.subr.mxu0 0.0
          %1617 = vmatpush1.msra.mxu0 0.0
          %1618 = vmatprep.subr.mxu0 0.0
          %1619 = vmatpush1.msra.mxu0 0.0
          %1620 = vmatprep.subr.mxu0 0.0
          %1621 = vmatpush1.msra.mxu0 0.0
          %1622 = vmatprep.subr.mxu0 0.0
          %1623 = vmatpush1.msra.mxu0 0.0
          %1624 = vmatprep.mubr.f32.mxu0 0.0
          %1625 = vmatmul.mubr.f32.gmra.mrb[0].mxu0 %v1558
          %v1626 = vpop.f32.mrb[0].mxu0
          %v1627 = vadd.f32 0.0, %v1626
          %v1628 = vpop.f32.mrb[0].mxu0
          %1629 = vdwg.mxu0
          %v1631 = vsel %vm1462, %v1547, 0
          %1633 = vmatprep.subr.mxu0 0.0
          %1634 = vmatpush1.msra.mxu0 %v1548
          %1635 = vmatprep.subr.mxu0 0.0
          %1636 = vmatpush1.msra.mxu0 %v1549
          %1637 = vmatprep.subr.mxu0 0.0
          %1638 = vmatpush1.msra.mxu0 %v1550
          %1639 = vmatprep.subr.mxu0 0.0
          %1640 = vmatpush1.msra.mxu0 %v1551
          %1641 = vmatprep.subr.mxu0 0.0
          %1642 = vmatpush1.msra.mxu0 0.0
          %1643 = vmatprep.subr.mxu0 0.0
          %1644 = vmatpush1.msra.mxu0 0.0
          %1645 = vmatprep.subr.mxu0 0.0
          %1646 = vmatpush1.msra.mxu0 0.0
          %1647 = vmatprep.subr.mxu0 0.0
          %1648 = vmatpush1.msra.mxu0 0.0
          %1649 = vmatprep.subr.mxu0 0.0
          %1650 = vmatpush1.msra.mxu0 0.0
          %1651 = vmatprep.subr.mxu0 0.0
          %1652 = vmatpush1.msra.mxu0 0.0
          %1653 = vmatprep.subr.mxu0 0.0
          %1654 = vmatpush1.msra.mxu0 0.0
          %1655 = vmatprep.subr.mxu0 0.0
          %1656 = vmatpush1.msra.mxu0 0.0
          %1657 = vmatprep.subr.mxu0 0.0
          %1658 = vmatpush1.msra.mxu0 0.0
          %1659 = vmatprep.subr.mxu0 0.0
          %1660 = vmatpush1.msra.mxu0 0.0
          %1661 = vmatprep.subr.mxu0 0.0
          %1662 = vmatpush1.msra.mxu0 0.0
          %1663 = vmatprep.subr.mxu0 0.0
          %1664 = vmatpush1.msra.mxu0 0.0
          %1665 = vmatprep.subr.mxu0 0.0
          %1666 = vmatpush1.msra.mxu0 0.0
          %1667 = vmatprep.subr.mxu0 0.0
          %1668 = vmatpush1.msra.mxu0 0.0
          %1669 = vmatprep.subr.mxu0 0.0
          %1670 = vmatpush1.msra.mxu0 0.0
          %1671 = vmatprep.subr.mxu0 0.0
          %1672 = vmatpush1.msra.mxu0 0.0
          %1673 = vmatprep.subr.mxu0 0.0
          %1674 = vmatpush1.msra.mxu0 0.0
          %1675 = vmatprep.subr.mxu0 0.0
          %1676 = vmatpush1.msra.mxu0 0.0
          %1677 = vmatprep.subr.mxu0 0.0
          %1678 = vmatpush1.msra.mxu0 0.0
          %1679 = vmatprep.subr.mxu0 0.0
          %1680 = vmatpush1.msra.mxu0 0.0
          %1681 = vmatprep.subr.mxu0 0.0
          %1682 = vmatpush1.msra.mxu0 0.0
          %1683 = vmatprep.subr.mxu0 0.0
          %1684 = vmatpush1.msra.mxu0 0.0
          %1685 = vmatprep.subr.mxu0 0.0
          %1686 = vmatpush1.msra.mxu0 0.0
          %1687 = vmatprep.subr.mxu0 0.0
          %1688 = vmatpush1.msra.mxu0 0.0
          %1689 = vmatprep.subr.mxu0 0.0
          %1690 = vmatpush1.msra.mxu0 0.0
          %1691 = vmatprep.subr.mxu0 0.0
          %1692 = vmatpush1.msra.mxu0 0.0
          %1693 = vmatprep.subr.mxu0 0.0
          %1694 = vmatpush1.msra.mxu0 0.0
          %1695 = vmatprep.subr.mxu0 0.0
          %1696 = vmatpush1.msra.mxu0 0.0
          %1697 = vmatprep.mubr.f32.mxu0 0.0
          %1698 = vmatmul.mubr.f32.gmra.mrb[0].mxu0 %v1631
          %v1699 = vpop.f32.mrb[0].mxu0
          %v1700 = vadd.f32 %v1627, %v1699
          %v1701 = vpop.f32.mrb[0].mxu0
          %1702 = vdwg.mxu0
          %v1703 = vld [vmem:[%s13] sm:$0x1]
          %v1705 = vlaneseq
          %v1706 = vshrl.u32 %v1705, 7
          %v1707 = vsub.s32 0, %v1706
          %v1708 = vrot.slane %v1703, %v1707
          %v1710 = vadd.f32 %v1700, %v1708
          %v1711 = vld [vmem:[%s14] sm:$0x1]
          %v1712 = vsel %vm1462, %v1710, 0.0
          %1713 = vadd.xlane.f32.xlu0 %v1712
          %v1714 = vpop.xlane.xlu0 %1713
          %v1715 = vrcp.pop 32.0
          %v1716 = vmul.f32 %v1714, %v1715
          %v1717 = vmul.f32 %v1710, %v1710
          %v1718 = vsel %vm1462, %v1717, 0.0
          %1719 = vadd.xlane.f32.xlu0 %v1718
          %v1720 = vpop.xlane.xlu0 %1719
          %v1721 = vmul.f32 %v1720, %v1715
          %v1722 = vmul.f32 %v1716, %v1716
          %v1723 = vsub.f32 %v1721, %v1722
          %v1724 = vadd.f32 %v1723, 1e-05
          %v1725 = vrsqrt.pop %v1724
          %v1726 = vsub.f32 %v1710, %v1716
          %v1727 = vmul.f32 %v1726, %v1725
          %v1729 = vlaneseq
          %v1730 = vshrl.u32 %v1729, 7
          %v1731 = vsub.s32 0, %v1730
          %v1732 = vrot.slane %v1711, %v1731
          %v1734 = vmul.f32 %v1727, %v1732
          %v1735 = vmul.f32 %v1734, 0.5
          %v1736 = vtanh.pop %v1735
          %v1737 = vmul.f32 %v1735, %v1736
          %v1738 = vadd.f32 %v1737, %v1735
          %v1739 = vld [vmem:[#allocation15] sm:$0xff]
          %v1740 = vld [vmem:[#allocation15 + $0x8] sm:$0xff]
          %v1741 = vld [vmem:[#allocation15 + $0x10] sm:$0xff]
          %v1742 = vld [vmem:[#allocation15 + $0x18] sm:$0xff]
          %v1743 = vld [vmem:[%s16] sm:$0x1]
          %v1745 = vlaneseq
          %v1746 = vshrl.u32 %v1745, 7
          %v1747 = vsub.s32 0, %v1746
          %v1748 = vrot.slane %v1743, %v1747
          %v1751 = vsel %vm1462, %v1738, 0
          %1753 = vmatprep.subr.mxu0 0.0
          %1754 = vmatpush1.msra.mxu0 %v1739
          %1755 = vmatprep.subr.mxu0 0.0
          %1756 = vmatpush1.msra.mxu0 %v1740
          %1757 = vmatprep.subr.mxu0 0.0
          %1758 = vmatpush1.msra.mxu0 %v1741
          %1759 = vmatprep.subr.mxu0 0.0
          %1760 = vmatpush1.msra.mxu0 %v1742
          %1761 = vmatprep.subr.mxu0 0.0
          %1762 = vmatpush1.msra.mxu0 0.0
          %1763 = vmatprep.subr.mxu0 0.0
          %1764 = vmatpush1.msra.mxu0 0.0
          %1765 = vmatprep.subr.mxu0 0.0
          %1766 = vmatpush1.msra.mxu0 0.0
          %1767 = vmatprep.subr.mxu0 0.0
          %1768 = vmatpush1.msra.mxu0 0.0
          %1769 = vmatprep.subr.mxu0 0.0
          %1770 = vmatpush1.msra.mxu0 0.0
          %1771 = vmatprep.subr.mxu0 0.0
          %1772 = vmatpush1.msra.mxu0 0.0
          %1773 = vmatprep.subr.mxu0 0.0
          %1774 = vmatpush1.msra.mxu0 0.0
          %1775 = vmatprep.subr.mxu0 0.0
          %1776 = vmatpush1.msra.mxu0 0.0
          %1777 = vmatprep.subr.mxu0 0.0
          %1778 = vmatpush1.msra.mxu0 0.0
          %1779 = vmatprep.subr.mxu0 0.0
          %1780 = vmatpush1.msra.mxu0 0.0
          %1781 = vmatprep.subr.mxu0 0.0
          %1782 = vmatpush1.msra.mxu0 0.0
          %1783 = vmatprep.subr.mxu0 0.0
          %1784 = vmatpush1.msra.mxu0 0.0
          %1785 = vmatprep.subr.mxu0 0.0
          %1786 = vmatpush1.msra.mxu0 0.0
          %1787 = vmatprep.subr.mxu0 0.0
          %1788 = vmatpush1.msra.mxu0 0.0
          %1789 = vmatprep.subr.mxu0 0.0
          %1790 = vmatpush1.msra.mxu0 0.0
          %1791 = vmatprep.subr.mxu0 0.0
          %1792 = vmatpush1.msra.mxu0 0.0
          %1793 = vmatprep.subr.mxu0 0.0
          %1794 = vmatpush1.msra.mxu0 0.0
          %1795 = vmatprep.subr.mxu0 0.0
          %1796 = vmatpush1.msra.mxu0 0.0
          %1797 = vmatprep.subr.mxu0 0.0
          %1798 = vmatpush1.msra.mxu0 0.0
          %1799 = vmatprep.subr.mxu0 0.0
          %1800 = vmatpush1.msra.mxu0 0.0
          %1801 = vmatprep.subr.mxu0 0.0
          %1802 = vmatpush1.msra.mxu0 0.0
          %1803 = vmatprep.subr.mxu0 0.0
          %1804 = vmatpush1.msra.mxu0 0.0
          %1805 = vmatprep.subr.mxu0 0.0
          %1806 = vmatpush1.msra.mxu0 0.0
          %1807 = vmatprep.subr.mxu0 0.0
          %1808 = vmatpush1.msra.mxu0 0.0
          %1809 = vmatprep.subr.mxu0 0.0
          %1810 = vmatpush1.msra.mxu0 0.0
          %1811 = vmatprep.subr.mxu0 0.0
          %1812 = vmatpush1.msra.mxu0 0.0
          %1813 = vmatprep.subr.mxu0 0.0
          %1814 = vmatpush1.msra.mxu0 0.0
          %1815 = vmatprep.subr.mxu0 0.0
          %1816 = vmatpush1.msra.mxu0 0.0
          %1817 = vmatprep.mubr.f32.mxu0 0.0
          %1818 = vmatmul.mubr.f32.gmra.mrb[0].mxu0 %v1751
          %v1819 = vpop.f32.mrb[0].mxu0
          %v1820 = vadd.f32 %v1748, %v1819
          %v1821 = vpop.f32.mrb[0].mxu0
          %1822 = vdwg.mxu0
          %1823 = vst.msk [vmem:[%s734] sm:$0xff] %vm1462, %v1820
        $region128: #{tpu_custom_call.1} parent=87 // pred_fallthru
          _
        %s1824 = sand.u32 %s449, 1
        %s1825 = scalar_lea.sflag [#allocation5], %s1824
        %s1826 = sand.u32 %s449, 1
        %s1827 = smul.addr %s1826, 8
        %s1828 = scalar_lea.vmem [#allocation17], %s1827
        // Predicated region
        $region129: #{tpu_custom_call.1} parent=87 // pred_check
          %p1829 = pneg %p459
        $region130: #{tpu_custom_call.1} parent=87 // pred_check_branch
          %1831 = sbr.rel (%p1829) target = $region132
        $region131: #{tpu_custom_call.1} parent=87 // pred_region
          %s1833 = ssub.s32 128, 128
          %1834 = vsyncadd %s1825, %s1833
          %s1835 = sadd.s32 %s46, %s45
          %s1836 = smul.addr %s1835, 128
          %s1837 = scalar_lea.hbm %s17, %s1836
          %s1839 = sshll.u32 %s1828, 4
          %s1840 = int_to_ptr.vmem [resolvable:$true] %s1839
          %1842 = dma.vmem_to_hbm [thread:$0]  %s1840, 128, %s1837, %s1825
        $region132: #{tpu_custom_call.1} parent=87 // pred_fallthru
          _
      $region88: #{tpu_custom_call.1} parent=5 // pred_fallthru
        _
      %p1843 = scmp.le.s32.totalorder 2, %s35
      // Predicated region
      $region133: #{tpu_custom_call.1} parent=5 // pred_check
        %p1844 = pneg %p1843
      $region134: #{tpu_custom_call.1} parent=5 // pred_check_branch
        %1846 = sbr.rel (%p1844) target = $region136
      $region135: #{tpu_custom_call.1} parent=5 // pred_region
        %s1847 = ssub.s32 %s35, 2
        // Predicated region
        $region137: #{tpu_custom_call.1} parent=135 // pred_check
          %p1848 = pneg %p465
        $region138: #{tpu_custom_call.1} parent=135 // pred_check_branch
          %1850 = sbr.rel (%p1848) target = $region140
        $region139: #{tpu_custom_call.1} parent=135 // pred_region
          %s1851 = sand.u32 %s450, 1
          %s1852 = scalar_lea.sflag [#allocation5], %s1851
          %s1853 = sand.u32 %s450, 1
          %s1854 = smul.addr %s1853, 8
          %s1855 = scalar_lea.vmem [#allocation17], %s1854
          %1856 = dma.done %s1852, 128
        $region140: #{tpu_custom_call.1} parent=135 // pred_fallthru
          _
      $region136: #{tpu_custom_call.1} parent=5 // pred_fallthru
        _
    $region6: #{tpu_custom_call.1} parent=1 // loop_footer
      %s39 = sadd.s32 1, %s35
    $region7: #{tpu_custom_call.1} parent=1 // loop_footer_branch
      %34 = sbr.rel target = $region3
    $region8: #{tpu_custom_call.1} parent=1 // loop_exit
      _
    %1857 = vsyncpa [#allocation4], 1
    %s1858 = scalar_lea.sflag [#allocation4], 1
    %1859 = vsyncpa %s1858, 1
    %1860 = vsyncpa [#allocation7], 1
    %s1861 = scalar_lea.sflag [#allocation7], 1
    %1862 = vsyncpa %s1861, 1
    %1863 = vsyncpa [#allocation10], 1
    %1864 = vsyncpa [#allocation13], 1
    %1865 = vsyncpa [#allocation16], 1
    %1866 = vsyncpa [#allocation5], 1
    %s1867 = scalar_lea.sflag [#allocation5], 1
    %1868 = vsyncpa %s1867, 1

</llo_original>
